<compile_context>
chip_gen: v7x
topology: tpu7x:2x2x1
jax: 0.10.0
libtpu: 0.0.40
codegen_flags: <defaults>
</compile_context>

<pallas_src>
import jax
import jax.numpy as jnp
from jax.experimental import pallas as pl
from jax.experimental.pallas import tpu as pltpu


def _fused_relu_conv1x1_bn_relu_kernel(x_ref, w_ref, gamma_ref, beta_ref, o_ref):
    # x_ref:     (Cin, M)   f32  -- full channel-major pixel slab (shared by all steps)
    # w_ref:     (Cb,  Cin) bf16 -- this grid step's slice of the Cout axis
    # gamma_ref: (Cb, 1)    f32
    # beta_ref:  (Cb, 1)    f32
    # o_ref:     (Cb, M)    f32
    # relu53 in f32 (native on all gens incl. v5e), then cast to bf16 for the MXU.
    x = jnp.maximum(x_ref[...], 0.0).astype(jnp.bfloat16)
    # conv2d53 (1x1, no bias): (Cb, Cin) @ (Cin, M) -> (Cb, M), f32 accumulation.
    y = jnp.dot(w_ref[...], x, preferred_element_type=jnp.float32)

    # batchnorm2d54, training mode: per-channel stats over all M pixels.
    # One fused traversal for sum and sum-of-squares; biased variance, eps=1e-5.
    inv_m = 1.0 / y.shape[1]                                  # M is the true pixel count
    sum_y = jnp.sum(y, axis=1, keepdims=True)                 # (Cb, 1)
    sum_y2 = jnp.sum(y * y, axis=1, keepdims=True)            # (Cb, 1)
    mean = sum_y * inv_m
    var = jnp.maximum(sum_y2 * inv_m - mean * mean, 0.0)      # clamp cancellation
    inv_std = jax.lax.rsqrt(var + 1e-5)

    # Fold BN into per-channel scale/shift, then relu54 — single finalize pass.
    scale = gamma_ref[...] * inv_std                          # (Cb, 1)
    shift = beta_ref[...] - mean * scale                      # (Cb, 1)
    o_ref[...] = jnp.maximum(y * scale + shift, 0.0)


def prepare_params(conv_w, gamma, beta):
    """Reshape/cast parameters once (hoist out of the per-step activation path)."""
    Cout, Cin = conv_w.shape[0], conv_w.shape[1]
    w2d = conv_w.reshape(Cout, Cin).astype(jnp.bfloat16)
    g2d = gamma.reshape(Cout, 1).astype(jnp.float32)
    b2d = beta.reshape(Cout, 1).astype(jnp.float32)
    return w2d, g2d, b2d


def _tensorcores_per_chip():
    # v7x has 2 TensorCores per chip; v5e/v6e have 1.  Fall back to 1 on any doubt.
    try:
        kind = jax.devices()[0].device_kind.lower()
    except Exception:
        return 1
    return 2 if "v7" in kind else 1


def fused_forward(x_nchw, w2d, g2d, b2d):
    """x_nchw: (N, Cin, H, W) f32; w2d: (Cout, Cin) bf16; g2d/b2d: (Cout, 1) f32."""
    N, Cin, H, W = x_nchw.shape
    Cout = w2d.shape[0]
    M = N * H * W

    # Channel-major glue: free reshape for N=1; one transpose each side for N>1.
    if N == 1:
        x2d = x_nchw.reshape(Cin, M)
    else:
        x2d = jnp.transpose(x_nchw, (1, 0, 2, 3)).reshape(Cin, M)
    x2d = x2d.astype(jnp.float32)  # no-op for f32 inputs; the bf16 cast is in-kernel

    # Split Cout across TensorCores only where it pays (v7x); keep 1-wide otherwise.
    nblk = _tensorcores_per_chip()
    if Cout % nblk != 0 or (Cout // nblk) % 8 != 0:
        nblk = 1
    cb = Cout // nblk

    cost = pl.CostEstimate(
        flops=2 * M * Cin * Cout + 8 * M * Cout,
        transcendentals=Cout,
        bytes_accessed=(Cin * M * 4 + Cout * Cin * 2 + 2 * Cout * 4 + Cout * M * 4),
    )

    out2d = pl.pallas_call(
        _fused_relu_conv1x1_bn_relu_kernel,
        out_shape=jax.ShapeDtypeStruct((Cout, M), jnp.float32),
        grid=(nblk,),
        in_specs=[
            pl.BlockSpec((Cin, M), lambda i: (0, 0)),   # full x, shared across steps
            pl.BlockSpec((cb, Cin), lambda i: (i, 0)),  # Cout slice of weights
            pl.BlockSpec((cb, 1), lambda i: (i, 0)),    # gamma slice
            pl.BlockSpec((cb, 1), lambda i: (i, 0)),    # beta slice
        ],
        out_specs=pl.BlockSpec((cb, M), lambda i: (i, 0)),
        compiler_params=pltpu.CompilerParams(dimension_semantics=("parallel",)),
        cost_estimate=cost,
    )(x2d, w2d, g2d, b2d)

    # (Cout, M) -> (N, Cout, H, W); free reshape for N=1.
    if N == 1:
        return out2d.reshape(1, Cout, H, W)
    return jnp.transpose(out2d.reshape(Cout, N, H, W), (1, 0, 2, 3))


def _reference(x, conv_w, gamma, beta):
    """Pure-JAX reference of the PyTorch module (training-mode BN)."""
    xr = jnp.maximum(x, 0.0)
    y = jax.lax.conv_general_dilated(
        xr, conv_w, window_strides=(1, 1), padding="VALID",
        dimension_numbers=("NCHW", "OIHW", "NCHW"))
    mean = jnp.mean(y, axis=(0, 2, 3), keepdims=True)
    var = jnp.var(y, axis=(0, 2, 3), keepdims=True)
    yhat = (y - mean) * jax.lax.rsqrt(var + 1e-5)
    out = yhat * gamma.reshape(1, -1, 1, 1) + beta.reshape(1, -1, 1, 1)
    return jnp.maximum(out, 0.0)


if __name__ == "__main__":
    # Shapes implied by the module: input (1, 720, 14, 14), 1x1 conv 720 -> 192.
    N, Cin, H, W = 1, 720, 14, 14
    Cout = 192

    key = jax.random.PRNGKey(0)
    kx, kw, kg, kb = jax.random.split(key, 4)

    x = jax.random.normal(kx, (N, Cin, H, W), dtype=jnp.float32)
    conv_w = jax.random.normal(kw, (Cout, Cin, 1, 1), dtype=jnp.float32) * 0.05
    gamma = 1.0 + 0.1 * jax.random.normal(kg, (Cout,), dtype=jnp.float32)
    beta = 0.1 * jax.random.normal(kb, (Cout,), dtype=jnp.float32)

    w2d, g2d, b2d = prepare_params(conv_w, gamma, beta)
    out = fused_forward(x, w2d, g2d, b2d)
    jax.block_until_ready(out)

    assert out.shape == (N, Cout, H, W), out.shape

    # Loose tolerance: the conv runs on bf16 inputs with f32 accumulation.
    ref = _reference(x, conv_w, gamma, beta)
    max_err = float(jnp.max(jnp.abs(out - ref)))
    assert max_err < 1e-1, f"max abs error too large: {max_err}"

    print("KERNEL_OK")
</pallas_src>

<mosaic_0001>
module attributes {stable_mosaic.version = 11 : i64} {
  func.func @_fused_relu_conv1x1_bn_relu_kernel(%arg0: i32, %arg1: memref<720x196xf32, #tpu.memory_space<vmem>>, %arg2: memref<192x720xbf16, #tpu.memory_space<vmem>>, %arg3: memref<192x1xf32, #tpu.memory_space<vmem>>, %arg4: memref<192x1xf32, #tpu.memory_space<vmem>>, %arg5: memref<192x196xf32, #tpu.memory_space<vmem>>) attributes {dimension_semantics = [#tpu.dimension_semantics<parallel>], iteration_bounds = array<i64: 1>, scalar_prefetch = 0 : i64, scratch_operands = 0 : i64, tpu.core_type = #tpu.core_type<tc>, window_params = [{pipeline_mode = #tpu.pipeline_mode<synchronous>, transform_indices = @transform_0, window_bounds = array<i64: 720, 196>}, {transform_indices = @transform_1, window_bounds = array<i64: 192, 720>}, {transform_indices = @transform_2, window_bounds = array<i64: 192, 1>}, {transform_indices = @transform_3, window_bounds = array<i64: 192, 1>}, {transform_indices = @transform_4, window_bounds = array<i64: 192, 196>}]} {
    %c0 = arith.constant 0 : index
    %c0_0 = arith.constant 0 : index
    %0 = vector.load %arg1[%c0, %c0_0] : memref<720x196xf32, #tpu.memory_space<vmem>>, vector<720x196xf32>
    %cst = arith.constant 0.000000e+00 : f32
    %1 = vector.broadcast %cst : f32 to vector<720x196xf32>
    %2 = arith.maximumf %0, %1 : vector<720x196xf32>
    %3 = arith.truncf %2 : vector<720x196xf32> to vector<720x196xbf16>
    %c0_1 = arith.constant 0 : index
    %c0_2 = arith.constant 0 : index
    %4 = vector.load %arg2[%c0_1, %c0_2] : memref<192x720xbf16, #tpu.memory_space<vmem>>, vector<192x720xbf16>
    %cst_3 = arith.constant dense<0.000000e+00> : vector<192x196xf32>
    %5 = tpu.matmul %4, %3, %cst_3 {dimension_numbers = #tpu.dot_dimension_numbers<[1], [0], [0], [1], [0, 0, 1, 1], [], []>} : vector<192x720xbf16>, vector<720x196xbf16>, vector<192x196xf32> -> vector<192x196xf32>
    %cst_4 = arith.constant dense<0.000000e+00> : vector<192xf32>
    %6 = vector.multi_reduction <add>, %5, %cst_4 [1] : vector<192x196xf32> to vector<192xf32>
    %7 = vector.shape_cast %6 : vector<192xf32> to vector<192x1xf32>
    %8 = arith.mulf %5, %5 : vector<192x196xf32>
    %cst_5 = arith.constant dense<0.000000e+00> : vector<192xf32>
    %9 = vector.multi_reduction <add>, %8, %cst_5 [1] : vector<192x196xf32> to vector<192xf32>
    %10 = vector.shape_cast %9 : vector<192xf32> to vector<192x1xf32>
    %cst_6 = arith.constant 0.00510204071 : f32
    %11 = vector.broadcast %cst_6 : f32 to vector<192x1xf32>
    %12 = arith.mulf %7, %11 : vector<192x1xf32>
    %cst_7 = arith.constant 0.00510204071 : f32
    %13 = vector.broadcast %cst_7 : f32 to vector<192x1xf32>
    %14 = arith.mulf %10, %13 : vector<192x1xf32>
    %15 = arith.mulf %12, %12 : vector<192x1xf32>
    %16 = arith.subf %14, %15 : vector<192x1xf32>
    %cst_8 = arith.constant 0.000000e+00 : f32
    %17 = vector.broadcast %cst_8 : f32 to vector<192x1xf32>
    %18 = arith.maximumf %16, %17 : vector<192x1xf32>
    %cst_9 = arith.constant 9.99999974E-6 : f32
    %19 = vector.broadcast %cst_9 : f32 to vector<192x1xf32>
    %20 = arith.addf %18, %19 : vector<192x1xf32>
    %21 = math.rsqrt %20 : vector<192x1xf32>
    %c0_10 = arith.constant 0 : index
    %c0_11 = arith.constant 0 : index
    %22 = vector.load %arg3[%c0_10, %c0_11] : memref<192x1xf32, #tpu.memory_space<vmem>>, vector<192x1xf32>
    %23 = arith.mulf %22, %21 : vector<192x1xf32>
    %c0_12 = arith.constant 0 : index
    %c0_13 = arith.constant 0 : index
    %24 = vector.load %arg4[%c0_12, %c0_13] : memref<192x1xf32, #tpu.memory_space<vmem>>, vector<192x1xf32>
    %25 = arith.mulf %12, %23 : vector<192x1xf32>
    %26 = arith.subf %24, %25 : vector<192x1xf32>
    %27 = vector.broadcast %23 : vector<192x1xf32> to vector<192x196xf32>
    %28 = arith.mulf %5, %27 : vector<192x196xf32>
    %29 = vector.broadcast %26 : vector<192x1xf32> to vector<192x196xf32>
    %30 = arith.addf %28, %29 : vector<192x196xf32>
    %cst_14 = arith.constant 0.000000e+00 : f32
    %31 = vector.broadcast %cst_14 : f32 to vector<192x196xf32>
    %32 = arith.maximumf %30, %31 : vector<192x196xf32>
    %c0_15 = arith.constant 0 : index
    %c0_16 = arith.constant 0 : index
    %33 = vector.load %arg5[%c0_15, %c0_16] : memref<192x196xf32, #tpu.memory_space<vmem>>, vector<192x196xf32>
    tpu.vector_store %arg5[%c0_15, %c0_16], %32 {strides = array<i32>} : memref<192x196xf32, #tpu.memory_space<vmem>>, vector<192x196xf32>,
    return
  }
  func.func @transform_0(%arg0: i32) -> (i32, i32) {
    %c0_i32 = arith.constant 0 : i32
    %c0_i32_0 = arith.constant 0 : i32
    %c0_i32_1 = arith.constant 0 : i32
    return %c0_i32, %c0_i32_0 : i32, i32
  }
  func.func @transform_1(%arg0: i32) -> (i32, i32) {
    %c0_i32 = arith.constant 0 : i32
    %c0_i32_0 = arith.constant 0 : i32
    return %arg0, %c0_i32 : i32, i32
  }
  func.func @transform_2(%arg0: i32) -> (i32, i32) {
    %c0_i32 = arith.constant 0 : i32
    %c0_i32_0 = arith.constant 0 : i32
    return %arg0, %c0_i32 : i32, i32
  }
  func.func @transform_3(%arg0: i32) -> (i32, i32) {
    %c0_i32 = arith.constant 0 : i32
    %c0_i32_0 = arith.constant 0 : i32
    return %arg0, %c0_i32 : i32, i32
  }
  func.func @transform_4(%arg0: i32) -> (i32, i32) {
    %c0_i32 = arith.constant 0 : i32
    %c0_i32_0 = arith.constant 0 : i32
    return %arg0, %c0_i32 : i32, i32
  }
}

</mosaic_0001>

<llo_original>
// kernel: tpu_custom_call.1
$region0: #{tpu_custom_call.1}
  #allocation0 [shape = 'u32[]', space=smem, size = 0x4, offset = 0x4, fixed_abs, tag = 'smem constant byte address 0x4 - core index']
  #allocation1 [shape = 'u32[144,128]{1,0:T(1,128)}', space=vmem, size = 0x12000, scoped, tag = 'internal scratch']
  %s0 = inlined_call_operand.vmem [shape: f32[720,196], index: 0, kind: input, shape index: {}]
  %s1 = inlined_call_operand.vmem [shape: bf16[192,720], index: 1, kind: input, shape index: {}]
  %s2 = inlined_call_operand.vmem [shape: f32[192,1], index: 2, kind: input, shape index: {}]
  %s3 = inlined_call_operand.vmem [shape: f32[192,1], index: 3, kind: input, shape index: {}]
  %s4 = inlined_call_operand.hbm [shape: f32[192,196], index: 4, kind: output, shape index: {}]
  %s5 = sld [smem:[#allocation0]]
  $region26: #{tpu_custom_call.1} parent=0
    _
  %s7 = ssub.s32 1, %s5
  %s8 = scalar_select 0, %s7, %s5
  $region1: #{tpu_custom_call.1} parent=0
    #allocation2 [shape = 'u8[196608]{0}', space=vmem, size = 0x30000, scoped, tag = 'output window, operand 0, single buffered']
    #allocation3 [shape = 's32[1]{0}', space=sflag, size = 0x4, scoped, tag = 'scoped memory for tpu_custom_call.1']
    %9 = vsyncpa [#allocation3], 0
    // Predicated region
    $region2: #{tpu_custom_call.1} parent=1 // pred_check
      _
    $region3: #{tpu_custom_call.1} parent=1 // pred_check_branch
      %11 = sbr.rel (0) target = $region5
    $region4: #{tpu_custom_call.1} parent=1 // pred_region
      _
    $region5: #{tpu_custom_call.1} parent=1 // pred_fallthru
      _
    // Predicated region
    $region6: #{tpu_custom_call.1} parent=1 // pred_check
      _
    $region7: #{tpu_custom_call.1} parent=1 // pred_check_branch
      %13 = sbr.rel (0) target = $region9
    $region8: #{tpu_custom_call.1} parent=1 // pred_region
      _
    $region9: #{tpu_custom_call.1} parent=1 // pred_fallthru
      _
    // Predicated region
    $region10: #{tpu_custom_call.1} parent=1 // pred_check
      _
    $region11: #{tpu_custom_call.1} parent=1 // pred_check_branch
      %15 = sbr.rel (0) target = $region13
    $region12: #{tpu_custom_call.1} parent=1 // pred_region
      _
    $region13: #{tpu_custom_call.1} parent=1 // pred_fallthru
      _
    // Predicated region
    $region14: #{tpu_custom_call.1} parent=1 // pred_check
      _
    $region15: #{tpu_custom_call.1} parent=1 // pred_check_branch
      %17 = sbr.rel (0) target = $region17
    $region16: #{tpu_custom_call.1} parent=1 // pred_region
      _
    $region17: #{tpu_custom_call.1} parent=1 // pred_fallthru
      _
    %v19 = vld [vmem:[%s0] sm:$0xff]
    %v20 = vld [vmem:[%s0 + $0x8] sm:$0xff]
    %v21 = vld [vmem:[%s0 + $0x10] sm:$0xff]
    %v22 = vld [vmem:[%s0 + $0x18] sm:$0xff]
    %v23 = vld [vmem:[%s0 + $0x20] sm:$0xff]
    %v24 = vld [vmem:[%s0 + $0x28] sm:$0xff]
    %v25 = vld [vmem:[%s0 + $0x30] sm:$0xff]
    %v26 = vld [vmem:[%s0 + $0x38] sm:$0xff]
    %v27 = vld [vmem:[%s0 + $0x40] sm:$0xff]
    %v28 = vld [vmem:[%s0 + $0x48] sm:$0xff]
    %v29 = vld [vmem:[%s0 + $0x50] sm:$0xff]
    %v30 = vld [vmem:[%s0 + $0x58] sm:$0xff]
    %v31 = vld [vmem:[%s0 + $0x60] sm:$0xff]
    %v32 = vld [vmem:[%s0 + $0x68] sm:$0xff]
    %v33 = vld [vmem:[%s0 + $0x70] sm:$0xff]
    %v34 = vld [vmem:[%s0 + $0x78] sm:$0xff]
    %v35 = vld [vmem:[%s0 + $0x80] sm:$0xff]
    %v36 = vld [vmem:[%s0 + $0x88] sm:$0xff]
    %v37 = vld [vmem:[%s0 + $0x90] sm:$0xff]
    %v38 = vld [vmem:[%s0 + $0x98] sm:$0xff]
    %v39 = vld [vmem:[%s0 + $0xa0] sm:$0xff]
    %v40 = vld [vmem:[%s0 + $0xa8] sm:$0xff]
    %v41 = vld [vmem:[%s0 + $0xb0] sm:$0xff]
    %v42 = vld [vmem:[%s0 + $0xb8] sm:$0xff]
    %v43 = vld [vmem:[%s0 + $0xc0] sm:$0xff]
    %v44 = vld [vmem:[%s0 + $0xc8] sm:$0xff]
    %v45 = vld [vmem:[%s0 + $0xd0] sm:$0xff]
    %v46 = vld [vmem:[%s0 + $0xd8] sm:$0xff]
    %v47 = vld [vmem:[%s0 + $0xe0] sm:$0xff]
    %v48 = vld [vmem:[%s0 + $0xe8] sm:$0xff]
    %v49 = vld [vmem:[%s0 + $0xf0] sm:$0xff]
    %v50 = vld [vmem:[%s0 + $0xf8] sm:$0xff]
    %v51 = vld [vmem:[%s0 + $0x100] sm:$0xff]
    %v52 = vld [vmem:[%s0 + $0x108] sm:$0xff]
    %v53 = vld [vmem:[%s0 + $0x110] sm:$0xff]
    %v54 = vld [vmem:[%s0 + $0x118] sm:$0xff]
    %v55 = vld [vmem:[%s0 + $0x120] sm:$0xff]
    %v56 = vld [vmem:[%s0 + $0x128] sm:$0xff]
    %v57 = vld [vmem:[%s0 + $0x130] sm:$0xff]
    %v58 = vld [vmem:[%s0 + $0x138] sm:$0xff]
    %v59 = vld [vmem:[%s0 + $0x140] sm:$0xff]
    %v60 = vld [vmem:[%s0 + $0x148] sm:$0xff]
    %v61 = vld [vmem:[%s0 + $0x150] sm:$0xff]
    %v62 = vld [vmem:[%s0 + $0x158] sm:$0xff]
    %v63 = vld [vmem:[%s0 + $0x160] sm:$0xff]
    %v64 = vld [vmem:[%s0 + $0x168] sm:$0xff]
    %v65 = vld [vmem:[%s0 + $0x170] sm:$0xff]
    %v66 = vld [vmem:[%s0 + $0x178] sm:$0xff]
    %v67 = vld [vmem:[%s0 + $0x180] sm:$0xff]
    %v68 = vld [vmem:[%s0 + $0x188] sm:$0xff]
    %v69 = vld [vmem:[%s0 + $0x190] sm:$0xff]
    %v70 = vld [vmem:[%s0 + $0x198] sm:$0xff]
    %v71 = vld [vmem:[%s0 + $0x1a0] sm:$0xff]
    %v72 = vld [vmem:[%s0 + $0x1a8] sm:$0xff]
    %v73 = vld [vmem:[%s0 + $0x1b0] sm:$0xff]
    %v74 = vld [vmem:[%s0 + $0x1b8] sm:$0xff]
    %v75 = vld [vmem:[%s0 + $0x1c0] sm:$0xff]
    %v76 = vld [vmem:[%s0 + $0x1c8] sm:$0xff]
    %v77 = vld [vmem:[%s0 + $0x1d0] sm:$0xff]
    %v78 = vld [vmem:[%s0 + $0x1d8] sm:$0xff]
    %v79 = vld [vmem:[%s0 + $0x1e0] sm:$0xff]
    %v80 = vld [vmem:[%s0 + $0x1e8] sm:$0xff]
    %v81 = vld [vmem:[%s0 + $0x1f0] sm:$0xff]
    %v82 = vld [vmem:[%s0 + $0x1f8] sm:$0xff]
    %v83 = vld [vmem:[%s0 + $0x200] sm:$0xff]
    %v84 = vld [vmem:[%s0 + $0x208] sm:$0xff]
    %v85 = vld [vmem:[%s0 + $0x210] sm:$0xff]
    %v86 = vld [vmem:[%s0 + $0x218] sm:$0xff]
    %v87 = vld [vmem:[%s0 + $0x220] sm:$0xff]
    %v88 = vld [vmem:[%s0 + $0x228] sm:$0xff]
    %v89 = vld [vmem:[%s0 + $0x230] sm:$0xff]
    %v90 = vld [vmem:[%s0 + $0x238] sm:$0xff]
    %v91 = vld [vmem:[%s0 + $0x240] sm:$0xff]
    %v92 = vld [vmem:[%s0 + $0x248] sm:$0xff]
    %v93 = vld [vmem:[%s0 + $0x250] sm:$0xff]
    %v94 = vld [vmem:[%s0 + $0x258] sm:$0xff]
    %v95 = vld [vmem:[%s0 + $0x260] sm:$0xff]
    %v96 = vld [vmem:[%s0 + $0x268] sm:$0xff]
    %v97 = vld [vmem:[%s0 + $0x270] sm:$0xff]
    %v98 = vld [vmem:[%s0 + $0x278] sm:$0xff]
    %v99 = vld [vmem:[%s0 + $0x280] sm:$0xff]
    %v100 = vld [vmem:[%s0 + $0x288] sm:$0xff]
    %v101 = vld [vmem:[%s0 + $0x290] sm:$0xff]
    %v102 = vld [vmem:[%s0 + $0x298] sm:$0xff]
    %v103 = vld [vmem:[%s0 + $0x2a0] sm:$0xff]
    %v104 = vld [vmem:[%s0 + $0x2a8] sm:$0xff]
    %v105 = vld [vmem:[%s0 + $0x2b0] sm:$0xff]
    %v106 = vld [vmem:[%s0 + $0x2b8] sm:$0xff]
    %v107 = vld [vmem:[%s0 + $0x2c0] sm:$0xff]
    %v108 = vld [vmem:[%s0 + $0x2c8] sm:$0xff]
    %v109 = vld [vmem:[%s0 + $0x2d0] sm:$0xff]
    %v110 = vld [vmem:[%s0 + $0x2d8] sm:$0xff]
    %v111 = vld [vmem:[%s0 + $0x2e0] sm:$0xff]
    %v112 = vld [vmem:[%s0 + $0x2e8] sm:$0xff]
    %v113 = vld [vmem:[%s0 + $0x2f0] sm:$0xff]
    %v114 = vld [vmem:[%s0 + $0x2f8] sm:$0xff]
    %v115 = vld [vmem:[%s0 + $0x300] sm:$0xff]
    %v116 = vld [vmem:[%s0 + $0x308] sm:$0xff]
    %v117 = vld [vmem:[%s0 + $0x310] sm:$0xff]
    %v118 = vld [vmem:[%s0 + $0x318] sm:$0xff]
    %v119 = vld [vmem:[%s0 + $0x320] sm:$0xff]
    %v120 = vld [vmem:[%s0 + $0x328] sm:$0xff]
    %v121 = vld [vmem:[%s0 + $0x330] sm:$0xff]
    %v122 = vld [vmem:[%s0 + $0x338] sm:$0xff]
    %v123 = vld [vmem:[%s0 + $0x340] sm:$0xff]
    %v124 = vld [vmem:[%s0 + $0x348] sm:$0xff]
    %v125 = vld [vmem:[%s0 + $0x350] sm:$0xff]
    %v126 = vld [vmem:[%s0 + $0x358] sm:$0xff]
    %v127 = vld [vmem:[%s0 + $0x360] sm:$0xff]
    %v128 = vld [vmem:[%s0 + $0x368] sm:$0xff]
    %v129 = vld [vmem:[%s0 + $0x370] sm:$0xff]
    %v130 = vld [vmem:[%s0 + $0x378] sm:$0xff]
    %v131 = vld [vmem:[%s0 + $0x380] sm:$0xff]
    %v132 = vld [vmem:[%s0 + $0x388] sm:$0xff]
    %v133 = vld [vmem:[%s0 + $0x390] sm:$0xff]
    %v134 = vld [vmem:[%s0 + $0x398] sm:$0xff]
    %v135 = vld [vmem:[%s0 + $0x3a0] sm:$0xff]
    %v136 = vld [vmem:[%s0 + $0x3a8] sm:$0xff]
    %v137 = vld [vmem:[%s0 + $0x3b0] sm:$0xff]
    %v138 = vld [vmem:[%s0 + $0x3b8] sm:$0xff]
    %v139 = vld [vmem:[%s0 + $0x3c0] sm:$0xff]
    %v140 = vld [vmem:[%s0 + $0x3c8] sm:$0xff]
    %v141 = vld [vmem:[%s0 + $0x3d0] sm:$0xff]
    %v142 = vld [vmem:[%s0 + $0x3d8] sm:$0xff]
    %v143 = vld [vmem:[%s0 + $0x3e0] sm:$0xff]
    %v144 = vld [vmem:[%s0 + $0x3e8] sm:$0xff]
    %v145 = vld [vmem:[%s0 + $0x3f0] sm:$0xff]
    %v146 = vld [vmem:[%s0 + $0x3f8] sm:$0xff]
    %v147 = vld [vmem:[%s0 + $0x400] sm:$0xff]
    %v148 = vld [vmem:[%s0 + $0x408] sm:$0xff]
    %v149 = vld [vmem:[%s0 + $0x410] sm:$0xff]
    %v150 = vld [vmem:[%s0 + $0x418] sm:$0xff]
    %v151 = vld [vmem:[%s0 + $0x420] sm:$0xff]
    %v152 = vld [vmem:[%s0 + $0x428] sm:$0xff]
    %v153 = vld [vmem:[%s0 + $0x430] sm:$0xff]
    %v154 = vld [vmem:[%s0 + $0x438] sm:$0xff]
    %v155 = vld [vmem:[%s0 + $0x440] sm:$0xff]
    %v156 = vld [vmem:[%s0 + $0x448] sm:$0xff]
    %v157 = vld [vmem:[%s0 + $0x450] sm:$0xff]
    %v158 = vld [vmem:[%s0 + $0x458] sm:$0xff]
    %v159 = vld [vmem:[%s0 + $0x460] sm:$0xff]
    %v160 = vld [vmem:[%s0 + $0x468] sm:$0xff]
    %v161 = vld [vmem:[%s0 + $0x470] sm:$0xff]
    %v162 = vld [vmem:[%s0 + $0x478] sm:$0xff]
    %v163 = vld [vmem:[%s0 + $0x480] sm:$0xff]
    %v164 = vld [vmem:[%s0 + $0x488] sm:$0xff]
    %v165 = vld [vmem:[%s0 + $0x490] sm:$0xff]
    %v166 = vld [vmem:[%s0 + $0x498] sm:$0xff]
    %v167 = vld [vmem:[%s0 + $0x4a0] sm:$0xff]
    %v168 = vld [vmem:[%s0 + $0x4a8] sm:$0xff]
    %v169 = vld [vmem:[%s0 + $0x4b0] sm:$0xff]
    %v170 = vld [vmem:[%s0 + $0x4b8] sm:$0xff]
    %v171 = vld [vmem:[%s0 + $0x4c0] sm:$0xff]
    %v172 = vld [vmem:[%s0 + $0x4c8] sm:$0xff]
    %v173 = vld [vmem:[%s0 + $0x4d0] sm:$0xff]
    %v174 = vld [vmem:[%s0 + $0x4d8] sm:$0xff]
    %v175 = vld [vmem:[%s0 + $0x4e0] sm:$0xff]
    %v176 = vld [vmem:[%s0 + $0x4e8] sm:$0xff]
    %v177 = vld [vmem:[%s0 + $0x4f0] sm:$0xff]
    %v178 = vld [vmem:[%s0 + $0x4f8] sm:$0xff]
    %v179 = vld [vmem:[%s0 + $0x500] sm:$0xff]
    %v180 = vld [vmem:[%s0 + $0x508] sm:$0xff]
    %v181 = vld [vmem:[%s0 + $0x510] sm:$0xff]
    %v182 = vld [vmem:[%s0 + $0x518] sm:$0xff]
    %v183 = vld [vmem:[%s0 + $0x520] sm:$0xff]
    %v184 = vld [vmem:[%s0 + $0x528] sm:$0xff]
    %v185 = vld [vmem:[%s0 + $0x530] sm:$0xff]
    %v186 = vld [vmem:[%s0 + $0x538] sm:$0xff]
    %v187 = vld [vmem:[%s0 + $0x540] sm:$0xff]
    %v188 = vld [vmem:[%s0 + $0x548] sm:$0xff]
    %v189 = vld [vmem:[%s0 + $0x550] sm:$0xff]
    %v190 = vld [vmem:[%s0 + $0x558] sm:$0xff]
    %v191 = vld [vmem:[%s0 + $0x560] sm:$0xff]
    %v192 = vld [vmem:[%s0 + $0x568] sm:$0xff]
    %v193 = vld [vmem:[%s0 + $0x570] sm:$0xff]
    %v194 = vld [vmem:[%s0 + $0x578] sm:$0xff]
    %v195 = vld [vmem:[%s0 + $0x580] sm:$0xff]
    %v196 = vld [vmem:[%s0 + $0x588] sm:$0xff]
    %v197 = vld [vmem:[%s0 + $0x590] sm:$0xff]
    %v198 = vld [vmem:[%s0 + $0x598] sm:$0xff]
    %v199 = vmax.f32 %v19, 0.0
    %v200 = vmax.f32 %v20, 0.0
    %v201 = vmax.f32 %v21, 0.0
    %v202 = vmax.f32 %v22, 0.0
    %v203 = vmax.f32 %v23, 0.0
    %v204 = vmax.f32 %v24, 0.0
    %v205 = vmax.f32 %v25, 0.0
    %v206 = vmax.f32 %v26, 0.0
    %v207 = vmax.f32 %v27, 0.0
    %v208 = vmax.f32 %v28, 0.0
    %v209 = vmax.f32 %v29, 0.0
    %v210 = vmax.f32 %v30, 0.0
    %v211 = vmax.f32 %v31, 0.0
    %v212 = vmax.f32 %v32, 0.0
    %v213 = vmax.f32 %v33, 0.0
    %v214 = vmax.f32 %v34, 0.0
    %v215 = vmax.f32 %v35, 0.0
    %v216 = vmax.f32 %v36, 0.0
    %v217 = vmax.f32 %v37, 0.0
    %v218 = vmax.f32 %v38, 0.0
    %v219 = vmax.f32 %v39, 0.0
    %v220 = vmax.f32 %v40, 0.0
    %v221 = vmax.f32 %v41, 0.0
    %v222 = vmax.f32 %v42, 0.0
    %v223 = vmax.f32 %v43, 0.0
    %v224 = vmax.f32 %v44, 0.0
    %v225 = vmax.f32 %v45, 0.0
    %v226 = vmax.f32 %v46, 0.0
    %v227 = vmax.f32 %v47, 0.0
    %v228 = vmax.f32 %v48, 0.0
    %v229 = vmax.f32 %v49, 0.0
    %v230 = vmax.f32 %v50, 0.0
    %v231 = vmax.f32 %v51, 0.0
    %v232 = vmax.f32 %v52, 0.0
    %v233 = vmax.f32 %v53, 0.0
    %v234 = vmax.f32 %v54, 0.0
    %v235 = vmax.f32 %v55, 0.0
    %v236 = vmax.f32 %v56, 0.0
    %v237 = vmax.f32 %v57, 0.0
    %v238 = vmax.f32 %v58, 0.0
    %v239 = vmax.f32 %v59, 0.0
    %v240 = vmax.f32 %v60, 0.0
    %v241 = vmax.f32 %v61, 0.0
    %v242 = vmax.f32 %v62, 0.0
    %v243 = vmax.f32 %v63, 0.0
    %v244 = vmax.f32 %v64, 0.0
    %v245 = vmax.f32 %v65, 0.0
    %v246 = vmax.f32 %v66, 0.0
    %v247 = vmax.f32 %v67, 0.0
    %v248 = vmax.f32 %v68, 0.0
    %v249 = vmax.f32 %v69, 0.0
    %v250 = vmax.f32 %v70, 0.0
    %v251 = vmax.f32 %v71, 0.0
    %v252 = vmax.f32 %v72, 0.0
    %v253 = vmax.f32 %v73, 0.0
    %v254 = vmax.f32 %v74, 0.0
    %v255 = vmax.f32 %v75, 0.0
    %v256 = vmax.f32 %v76, 0.0
    %v257 = vmax.f32 %v77, 0.0
    %v258 = vmax.f32 %v78, 0.0
    %v259 = vmax.f32 %v79, 0.0
    %v260 = vmax.f32 %v80, 0.0
    %v261 = vmax.f32 %v81, 0.0
    %v262 = vmax.f32 %v82, 0.0
    %v263 = vmax.f32 %v83, 0.0
    %v264 = vmax.f32 %v84, 0.0
    %v265 = vmax.f32 %v85, 0.0
    %v266 = vmax.f32 %v86, 0.0
    %v267 = vmax.f32 %v87, 0.0
    %v268 = vmax.f32 %v88, 0.0
    %v269 = vmax.f32 %v89, 0.0
    %v270 = vmax.f32 %v90, 0.0
    %v271 = vmax.f32 %v91, 0.0
    %v272 = vmax.f32 %v92, 0.0
    %v273 = vmax.f32 %v93, 0.0
    %v274 = vmax.f32 %v94, 0.0
    %v275 = vmax.f32 %v95, 0.0
    %v276 = vmax.f32 %v96, 0.0
    %v277 = vmax.f32 %v97, 0.0
    %v278 = vmax.f32 %v98, 0.0
    %v279 = vmax.f32 %v99, 0.0
    %v280 = vmax.f32 %v100, 0.0
    %v281 = vmax.f32 %v101, 0.0
    %v282 = vmax.f32 %v102, 0.0
    %v283 = vmax.f32 %v103, 0.0
    %v284 = vmax.f32 %v104, 0.0
    %v285 = vmax.f32 %v105, 0.0
    %v286 = vmax.f32 %v106, 0.0
    %v287 = vmax.f32 %v107, 0.0
    %v288 = vmax.f32 %v108, 0.0
    %v289 = vmax.f32 %v109, 0.0
    %v290 = vmax.f32 %v110, 0.0
    %v291 = vmax.f32 %v111, 0.0
    %v292 = vmax.f32 %v112, 0.0
    %v293 = vmax.f32 %v113, 0.0
    %v294 = vmax.f32 %v114, 0.0
    %v295 = vmax.f32 %v115, 0.0
    %v296 = vmax.f32 %v116, 0.0
    %v297 = vmax.f32 %v117, 0.0
    %v298 = vmax.f32 %v118, 0.0
    %v299 = vmax.f32 %v119, 0.0
    %v300 = vmax.f32 %v120, 0.0
    %v301 = vmax.f32 %v121, 0.0
    %v302 = vmax.f32 %v122, 0.0
    %v303 = vmax.f32 %v123, 0.0
    %v304 = vmax.f32 %v124, 0.0
    %v305 = vmax.f32 %v125, 0.0
    %v306 = vmax.f32 %v126, 0.0
    %v307 = vmax.f32 %v127, 0.0
    %v308 = vmax.f32 %v128, 0.0
    %v309 = vmax.f32 %v129, 0.0
    %v310 = vmax.f32 %v130, 0.0
    %v311 = vmax.f32 %v131, 0.0
    %v312 = vmax.f32 %v132, 0.0
    %v313 = vmax.f32 %v133, 0.0
    %v314 = vmax.f32 %v134, 0.0
    %v315 = vmax.f32 %v135, 0.0
    %v316 = vmax.f32 %v136, 0.0
    %v317 = vmax.f32 %v137, 0.0
    %v318 = vmax.f32 %v138, 0.0
    %v319 = vmax.f32 %v139, 0.0
    %v320 = vmax.f32 %v140, 0.0
    %v321 = vmax.f32 %v141, 0.0
    %v322 = vmax.f32 %v142, 0.0
    %v323 = vmax.f32 %v143, 0.0
    %v324 = vmax.f32 %v144, 0.0
    %v325 = vmax.f32 %v145, 0.0
    %v326 = vmax.f32 %v146, 0.0
    %v327 = vmax.f32 %v147, 0.0
    %v328 = vmax.f32 %v148, 0.0
    %v329 = vmax.f32 %v149, 0.0
    %v330 = vmax.f32 %v150, 0.0
    %v331 = vmax.f32 %v151, 0.0
    %v332 = vmax.f32 %v152, 0.0
    %v333 = vmax.f32 %v153, 0.0
    %v334 = vmax.f32 %v154, 0.0
    %v335 = vmax.f32 %v155, 0.0
    %v336 = vmax.f32 %v156, 0.0
    %v337 = vmax.f32 %v157, 0.0
    %v338 = vmax.f32 %v158, 0.0
    %v339 = vmax.f32 %v159, 0.0
    %v340 = vmax.f32 %v160, 0.0
    %v341 = vmax.f32 %v161, 0.0
    %v342 = vmax.f32 %v162, 0.0
    %v343 = vmax.f32 %v163, 0.0
    %v344 = vmax.f32 %v164, 0.0
    %v345 = vmax.f32 %v165, 0.0
    %v346 = vmax.f32 %v166, 0.0
    %v347 = vmax.f32 %v167, 0.0
    %v348 = vmax.f32 %v168, 0.0
    %v349 = vmax.f32 %v169, 0.0
    %v350 = vmax.f32 %v170, 0.0
    %v351 = vmax.f32 %v171, 0.0
    %v352 = vmax.f32 %v172, 0.0
    %v353 = vmax.f32 %v173, 0.0
    %v354 = vmax.f32 %v174, 0.0
    %v355 = vmax.f32 %v175, 0.0
    %v356 = vmax.f32 %v176, 0.0
    %v357 = vmax.f32 %v177, 0.0
    %v358 = vmax.f32 %v178, 0.0
    %v359 = vmax.f32 %v179, 0.0
    %v360 = vmax.f32 %v180, 0.0
    %v361 = vmax.f32 %v181, 0.0
    %v362 = vmax.f32 %v182, 0.0
    %v363 = vmax.f32 %v183, 0.0
    %v364 = vmax.f32 %v184, 0.0
    %v365 = vmax.f32 %v185, 0.0
    %v366 = vmax.f32 %v186, 0.0
    %v367 = vmax.f32 %v187, 0.0
    %v368 = vmax.f32 %v188, 0.0
    %v369 = vmax.f32 %v189, 0.0
    %v370 = vmax.f32 %v190, 0.0
    %v371 = vmax.f32 %v191, 0.0
    %v372 = vmax.f32 %v192, 0.0
    %v373 = vmax.f32 %v193, 0.0
    %v374 = vmax.f32 %v194, 0.0
    %v375 = vmax.f32 %v195, 0.0
    %v376 = vmax.f32 %v196, 0.0
    %v377 = vmax.f32 %v197, 0.0
    %v378 = vmax.f32 %v198, 0.0
    %v379 = vpack.c.bf16 %v201, %v199
    %v380 = vpack.c.bf16 %v202, %v200
    %v381 = vpack.c.bf16 %v205, %v203
    %v382 = vpack.c.bf16 %v206, %v204
    %v383 = vpack.c.bf16 %v209, %v207
    %v384 = vpack.c.bf16 %v210, %v208
    %v385 = vpack.c.bf16 %v213, %v211
    %v386 = vpack.c.bf16 %v214, %v212
    %v387 = vpack.c.bf16 %v217, %v215
    %v388 = vpack.c.bf16 %v218, %v216
    %v389 = vpack.c.bf16 %v221, %v219
    %v390 = vpack.c.bf16 %v222, %v220
    %v391 = vpack.c.bf16 %v225, %v223
    %v392 = vpack.c.bf16 %v226, %v224
    %v393 = vpack.c.bf16 %v229, %v227
    %v394 = vpack.c.bf16 %v230, %v228
    %v395 = vpack.c.bf16 %v233, %v231
    %v396 = vpack.c.bf16 %v234, %v232
    %v397 = vpack.c.bf16 %v237, %v235
    %v398 = vpack.c.bf16 %v238, %v236
    %v399 = vpack.c.bf16 %v241, %v239
    %v400 = vpack.c.bf16 %v242, %v240
    %v401 = vpack.c.bf16 %v245, %v243
    %v402 = vpack.c.bf16 %v246, %v244
    %v403 = vpack.c.bf16 %v249, %v247
    %v404 = vpack.c.bf16 %v250, %v248
    %v405 = vpack.c.bf16 %v253, %v251
    %v406 = vpack.c.bf16 %v254, %v252
    %v407 = vpack.c.bf16 %v257, %v255
    %v408 = vpack.c.bf16 %v258, %v256
    %v409 = vpack.c.bf16 %v261, %v259
    %v410 = vpack.c.bf16 %v262, %v260
    %v411 = vpack.c.bf16 %v265, %v263
    %v412 = vpack.c.bf16 %v266, %v264
    %v413 = vpack.c.bf16 %v269, %v267
    %v414 = vpack.c.bf16 %v270, %v268
    %v415 = vpack.c.bf16 %v273, %v271
    %v416 = vpack.c.bf16 %v274, %v272
    %v417 = vpack.c.bf16 %v277, %v275
    %v418 = vpack.c.bf16 %v278, %v276
    %v419 = vpack.c.bf16 %v281, %v279
    %v420 = vpack.c.bf16 %v282, %v280
    %v421 = vpack.c.bf16 %v285, %v283
    %v422 = vpack.c.bf16 %v286, %v284
    %v423 = vpack.c.bf16 %v289, %v287
    %v424 = vpack.c.bf16 %v290, %v288
    %v425 = vpack.c.bf16 %v293, %v291
    %v426 = vpack.c.bf16 %v294, %v292
    %v427 = vpack.c.bf16 %v297, %v295
    %v428 = vpack.c.bf16 %v298, %v296
    %v429 = vpack.c.bf16 %v301, %v299
    %v430 = vpack.c.bf16 %v302, %v300
    %v431 = vpack.c.bf16 %v305, %v303
    %v432 = vpack.c.bf16 %v306, %v304
    %v433 = vpack.c.bf16 %v309, %v307
    %v434 = vpack.c.bf16 %v310, %v308
    %v435 = vpack.c.bf16 %v313, %v311
    %v436 = vpack.c.bf16 %v314, %v312
    %v437 = vpack.c.bf16 %v317, %v315
    %v438 = vpack.c.bf16 %v318, %v316
    %v439 = vpack.c.bf16 %v321, %v319
    %v440 = vpack.c.bf16 %v322, %v320
    %v441 = vpack.c.bf16 %v325, %v323
    %v442 = vpack.c.bf16 %v326, %v324
    %v443 = vpack.c.bf16 %v329, %v327
    %v444 = vpack.c.bf16 %v330, %v328
    %v445 = vpack.c.bf16 %v333, %v331
    %v446 = vpack.c.bf16 %v334, %v332
    %v447 = vpack.c.bf16 %v337, %v335
    %v448 = vpack.c.bf16 %v338, %v336
    %v449 = vpack.c.bf16 %v341, %v339
    %v450 = vpack.c.bf16 %v342, %v340
    %v451 = vpack.c.bf16 %v345, %v343
    %v452 = vpack.c.bf16 %v346, %v344
    %v453 = vpack.c.bf16 %v349, %v347
    %v454 = vpack.c.bf16 %v350, %v348
    %v455 = vpack.c.bf16 %v353, %v351
    %v456 = vpack.c.bf16 %v354, %v352
    %v457 = vpack.c.bf16 %v357, %v355
    %v458 = vpack.c.bf16 %v358, %v356
    %v459 = vpack.c.bf16 %v361, %v359
    %v460 = vpack.c.bf16 %v362, %v360
    %v461 = vpack.c.bf16 %v365, %v363
    %v462 = vpack.c.bf16 %v366, %v364
    %v463 = vpack.c.bf16 %v369, %v367
    %v464 = vpack.c.bf16 %v370, %v368
    %v465 = vpack.c.bf16 %v373, %v371
    %v466 = vpack.c.bf16 %v374, %v372
    %v467 = vpack.c.bf16 %v377, %v375
    %v468 = vpack.c.bf16 %v378, %v376
    %v469 = vld [vmem:[%s1] sm:$0xff]
    %v470 = vld [vmem:[%s1 + $0x8] sm:$0xff]
    %v471 = vld [vmem:[%s1 + $0x10] sm:$0xff]
    %v472 = vld [vmem:[%s1 + $0x18] sm:$0xff]
    %v473 = vld [vmem:[%s1 + $0x20] sm:$0xff]
    %v474 = vld [vmem:[%s1 + $0x28] sm:$0xff]
    %v475 = vld [vmem:[%s1 + $0x30] sm:$0xff]
    %v476 = vld [vmem:[%s1 + $0x38] sm:$0xff]
    %v477 = vld [vmem:[%s1 + $0x40] sm:$0xff]
    %v478 = vld [vmem:[%s1 + $0x48] sm:$0xff]
    %v479 = vld [vmem:[%s1 + $0x50] sm:$0xff]
    %v480 = vld [vmem:[%s1 + $0x58] sm:$0xff]
    %v481 = vld [vmem:[%s1 + $0x60] sm:$0xff]
    %v482 = vld [vmem:[%s1 + $0x68] sm:$0xff]
    %v483 = vld [vmem:[%s1 + $0x70] sm:$0xff]
    %v484 = vld [vmem:[%s1 + $0x78] sm:$0xff]
    %v485 = vld [vmem:[%s1 + $0x80] sm:$0xff]
    %v486 = vld [vmem:[%s1 + $0x88] sm:$0xff]
    %v487 = vld [vmem:[%s1 + $0x90] sm:$0xff]
    %v488 = vld [vmem:[%s1 + $0x98] sm:$0xff]
    %v489 = vld [vmem:[%s1 + $0xa0] sm:$0xff]
    %v490 = vld [vmem:[%s1 + $0xa8] sm:$0xff]
    %v491 = vld [vmem:[%s1 + $0xb0] sm:$0xff]
    %v492 = vld [vmem:[%s1 + $0xb8] sm:$0xff]
    %v493 = vld [vmem:[%s1 + $0xc0] sm:$0xff]
    %v494 = vld [vmem:[%s1 + $0xc8] sm:$0xff]
    %v495 = vld [vmem:[%s1 + $0xd0] sm:$0xff]
    %v496 = vld [vmem:[%s1 + $0xd8] sm:$0xff]
    %v497 = vld [vmem:[%s1 + $0xe0] sm:$0xff]
    %v498 = vld [vmem:[%s1 + $0xe8] sm:$0xff]
    %v499 = vld [vmem:[%s1 + $0xf0] sm:$0xff]
    %v500 = vld [vmem:[%s1 + $0xf8] sm:$0xff]
    %v501 = vld [vmem:[%s1 + $0x100] sm:$0xff]
    %v502 = vld [vmem:[%s1 + $0x108] sm:$0xff]
    %v503 = vld [vmem:[%s1 + $0x110] sm:$0xff]
    %v504 = vld [vmem:[%s1 + $0x118] sm:$0xff]
    %v505 = vld [vmem:[%s1 + $0x120] sm:$0xff]
    %v506 = vld [vmem:[%s1 + $0x128] sm:$0xff]
    %v507 = vld [vmem:[%s1 + $0x130] sm:$0xff]
    %v508 = vld [vmem:[%s1 + $0x138] sm:$0xff]
    %v509 = vld [vmem:[%s1 + $0x140] sm:$0xff]
    %v510 = vld [vmem:[%s1 + $0x148] sm:$0xff]
    %v511 = vld [vmem:[%s1 + $0x150] sm:$0xff]
    %v512 = vld [vmem:[%s1 + $0x158] sm:$0xff]
    %v513 = vld [vmem:[%s1 + $0x160] sm:$0xff]
    %v514 = vld [vmem:[%s1 + $0x168] sm:$0xff]
    %v515 = vld [vmem:[%s1 + $0x170] sm:$0xff]
    %v516 = vld [vmem:[%s1 + $0x178] sm:$0xff]
    %v517 = vld [vmem:[%s1 + $0x180] sm:$0xff]
    %v518 = vld [vmem:[%s1 + $0x188] sm:$0xff]
    %v519 = vld [vmem:[%s1 + $0x190] sm:$0xff]
    %v520 = vld [vmem:[%s1 + $0x198] sm:$0xff]
    %v521 = vld [vmem:[%s1 + $0x1a0] sm:$0xff]
    %v522 = vld [vmem:[%s1 + $0x1a8] sm:$0xff]
    %v523 = vld [vmem:[%s1 + $0x1b0] sm:$0xff]
    %v524 = vld [vmem:[%s1 + $0x1b8] sm:$0xff]
    %v525 = vld [vmem:[%s1 + $0x1c0] sm:$0xff]
    %v526 = vld [vmem:[%s1 + $0x1c8] sm:$0xff]
    %v527 = vld [vmem:[%s1 + $0x1d0] sm:$0xff]
    %v528 = vld [vmem:[%s1 + $0x1d8] sm:$0xff]
    %v529 = vld [vmem:[%s1 + $0x1e0] sm:$0xff]
    %v530 = vld [vmem:[%s1 + $0x1e8] sm:$0xff]
    %v531 = vld [vmem:[%s1 + $0x1f0] sm:$0xff]
    %v532 = vld [vmem:[%s1 + $0x1f8] sm:$0xff]
    %v533 = vld [vmem:[%s1 + $0x200] sm:$0xff]
    %v534 = vld [vmem:[%s1 + $0x208] sm:$0xff]
    %v535 = vld [vmem:[%s1 + $0x210] sm:$0xff]
    %v536 = vld [vmem:[%s1 + $0x218] sm:$0xff]
    %v537 = vld [vmem:[%s1 + $0x220] sm:$0xff]
    %v538 = vld [vmem:[%s1 + $0x228] sm:$0xff]
    %v539 = vld [vmem:[%s1 + $0x230] sm:$0xff]
    %v540 = vld [vmem:[%s1 + $0x238] sm:$0xff]
    %v613 = vunpack.c.l.b16 %v469
    %v614 = vunpack.c.h.b16 %v469
    %v615 = vunpack.c.l.b16 %v470
    %v616 = vunpack.c.h.b16 %v470
    %v617 = vunpack.c.l.b16 %v471
    %v618 = vunpack.c.h.b16 %v471
    %v619 = vunpack.c.l.b16 %v472
    %v620 = vunpack.c.h.b16 %v472
    %v621 = vunpack.c.l.b16 %v473
    %v622 = vunpack.c.h.b16 %v473
    %v623 = vunpack.c.l.b16 %v474
    %v624 = vunpack.c.h.b16 %v474
    %v625 = vunpack.c.l.b16 %v475
    %v626 = vunpack.c.h.b16 %v475
    %v627 = vunpack.c.l.b16 %v476
    %v628 = vunpack.c.h.b16 %v476
    %v629 = vunpack.c.l.b16 %v477
    %v630 = vunpack.c.h.b16 %v477
    %v631 = vunpack.c.l.b16 %v478
    %v632 = vunpack.c.h.b16 %v478
    %v633 = vunpack.c.l.b16 %v479
    %v634 = vunpack.c.h.b16 %v479
    %v635 = vunpack.c.l.b16 %v480
    %v636 = vunpack.c.h.b16 %v480
    %v637 = vunpack.c.l.b16 %v481
    %v638 = vunpack.c.h.b16 %v481
    %v639 = vunpack.c.l.b16 %v482
    %v640 = vunpack.c.h.b16 %v482
    %v641 = vunpack.c.l.b16 %v483
    %v642 = vunpack.c.h.b16 %v483
    %v643 = vunpack.c.l.b16 %v484
    %v644 = vunpack.c.h.b16 %v484
    %v645 = vunpack.c.l.b16 %v485
    %v646 = vunpack.c.h.b16 %v485
    %v647 = vunpack.c.l.b16 %v486
    %v648 = vunpack.c.h.b16 %v486
    %v649 = vunpack.c.l.b16 %v487
    %v650 = vunpack.c.h.b16 %v487
    %v651 = vunpack.c.l.b16 %v488
    %v652 = vunpack.c.h.b16 %v488
    %v653 = vunpack.c.l.b16 %v489
    %v654 = vunpack.c.h.b16 %v489
    %v655 = vunpack.c.l.b16 %v490
    %v656 = vunpack.c.h.b16 %v490
    %v657 = vunpack.c.l.b16 %v491
    %v658 = vunpack.c.h.b16 %v491
    %v659 = vunpack.c.l.b16 %v492
    %v660 = vunpack.c.h.b16 %v492
    %v661 = vunpack.c.l.b16 %v493
    %v662 = vunpack.c.h.b16 %v493
    %v663 = vunpack.c.l.b16 %v494
    %v664 = vunpack.c.h.b16 %v494
    %v665 = vunpack.c.l.b16 %v495
    %v666 = vunpack.c.h.b16 %v495
    %v667 = vunpack.c.l.b16 %v496
    %v668 = vunpack.c.h.b16 %v496
    %v669 = vunpack.c.l.b16 %v497
    %v670 = vunpack.c.h.b16 %v497
    %v671 = vunpack.c.l.b16 %v498
    %v672 = vunpack.c.h.b16 %v498
    %v673 = vunpack.c.l.b16 %v499
    %v674 = vunpack.c.h.b16 %v499
    %v675 = vunpack.c.l.b16 %v500
    %v676 = vunpack.c.h.b16 %v500
    %v677 = vunpack.c.l.b16 %v501
    %v678 = vunpack.c.h.b16 %v501
    %v679 = vunpack.c.l.b16 %v502
    %v680 = vunpack.c.h.b16 %v502
    %v681 = vunpack.c.l.b16 %v503
    %v682 = vunpack.c.h.b16 %v503
    %v683 = vunpack.c.l.b16 %v504
    %v684 = vunpack.c.h.b16 %v504
    %v685 = vunpack.c.l.b16 %v505
    %v686 = vunpack.c.h.b16 %v505
    %v687 = vunpack.c.l.b16 %v506
    %v688 = vunpack.c.h.b16 %v506
    %v689 = vunpack.c.l.b16 %v507
    %v690 = vunpack.c.h.b16 %v507
    %v691 = vunpack.c.l.b16 %v508
    %v692 = vunpack.c.h.b16 %v508
    %v693 = vunpack.c.l.b16 %v509
    %v694 = vunpack.c.h.b16 %v509
    %v695 = vunpack.c.l.b16 %v510
    %v696 = vunpack.c.h.b16 %v510
    %v697 = vunpack.c.l.b16 %v511
    %v698 = vunpack.c.h.b16 %v511
    %v699 = vunpack.c.l.b16 %v512
    %v700 = vunpack.c.h.b16 %v512
    %v701 = vunpack.c.l.b16 %v513
    %v702 = vunpack.c.h.b16 %v513
    %v703 = vunpack.c.l.b16 %v514
    %v704 = vunpack.c.h.b16 %v514
    %v705 = vunpack.c.l.b16 %v515
    %v706 = vunpack.c.h.b16 %v515
    %v707 = vunpack.c.l.b16 %v516
    %v708 = vunpack.c.h.b16 %v516
    %v709 = vunpack.c.l.b16 %v517
    %v710 = vunpack.c.h.b16 %v517
    %v711 = vunpack.c.l.b16 %v518
    %v712 = vunpack.c.h.b16 %v518
    %v713 = vunpack.c.l.b16 %v519
    %v714 = vunpack.c.h.b16 %v519
    %v715 = vunpack.c.l.b16 %v520
    %v716 = vunpack.c.h.b16 %v520
    %v717 = vunpack.c.l.b16 %v521
    %v718 = vunpack.c.h.b16 %v521
    %v719 = vunpack.c.l.b16 %v522
    %v720 = vunpack.c.h.b16 %v522
    %v721 = vunpack.c.l.b16 %v523
    %v722 = vunpack.c.h.b16 %v523
    %v723 = vunpack.c.l.b16 %v524
    %v724 = vunpack.c.h.b16 %v524
    %v725 = vunpack.c.l.b16 %v525
    %v726 = vunpack.c.h.b16 %v525
    %v727 = vunpack.c.l.b16 %v526
    %v728 = vunpack.c.h.b16 %v526
    %v729 = vunpack.c.l.b16 %v527
    %v730 = vunpack.c.h.b16 %v527
    %v731 = vunpack.c.l.b16 %v528
    %v732 = vunpack.c.h.b16 %v528
    %v733 = vunpack.c.l.b16 %v529
    %v734 = vunpack.c.h.b16 %v529
    %v735 = vunpack.c.l.b16 %v530
    %v736 = vunpack.c.h.b16 %v530
    %v737 = vunpack.c.l.b16 %v531
    %v738 = vunpack.c.h.b16 %v531
    %v739 = vunpack.c.l.b16 %v532
    %v740 = vunpack.c.h.b16 %v532
    %v741 = vunpack.c.l.b16 %v533
    %v742 = vunpack.c.h.b16 %v533
    %v743 = vunpack.c.l.b16 %v534
    %v744 = vunpack.c.h.b16 %v534
    %v745 = vunpack.c.l.b16 %v535
    %v746 = vunpack.c.h.b16 %v535
    %v747 = vunpack.c.l.b16 %v536
    %v748 = vunpack.c.h.b16 %v536
    %v749 = vunpack.c.l.b16 %v537
    %v750 = vunpack.c.h.b16 %v537
    %v751 = vunpack.c.l.b16 %v538
    %v752 = vunpack.c.h.b16 %v538
    %v753 = vunpack.c.l.b16 %v539
    %v754 = vunpack.c.h.b16 %v539
    %v755 = vunpack.c.l.b16 %v540
    %v756 = vunpack.c.h.b16 %v540
    %v757 = vpack.c.b16 %v619, %v613
    %v758 = vpack.c.b16 %v620, %v614
    %v759 = vpack.c.b16 %v621, %v615
    %v760 = vpack.c.b16 %v622, %v616
    %v761 = vpack.c.b16 %v623, %v617
    %v762 = vpack.c.b16 %v624, %v618
    %v763 = vpack.c.b16 %v631, %v625
    %v764 = vpack.c.b16 %v632, %v626
    %v765 = vpack.c.b16 %v633, %v627
    %v766 = vpack.c.b16 %v634, %v628
    %v767 = vpack.c.b16 %v635, %v629
    %v768 = vpack.c.b16 %v636, %v630
    %v769 = vpack.c.b16 %v643, %v637
    %v770 = vpack.c.b16 %v644, %v638
    %v771 = vpack.c.b16 %v645, %v639
    %v772 = vpack.c.b16 %v646, %v640
    %v773 = vpack.c.b16 %v647, %v641
    %v774 = vpack.c.b16 %v648, %v642
    %v775 = vpack.c.b16 %v655, %v649
    %v776 = vpack.c.b16 %v656, %v650
    %v777 = vpack.c.b16 %v657, %v651
    %v778 = vpack.c.b16 %v658, %v652
    %v779 = vpack.c.b16 %v659, %v653
    %v780 = vpack.c.b16 %v660, %v654
    %v781 = vpack.c.b16 %v667, %v661
    %v782 = vpack.c.b16 %v668, %v662
    %v783 = vpack.c.b16 %v669, %v663
    %v784 = vpack.c.b16 %v670, %v664
    %v785 = vpack.c.b16 %v671, %v665
    %v786 = vpack.c.b16 %v672, %v666
    %v787 = vpack.c.b16 %v679, %v673
    %v788 = vpack.c.b16 %v680, %v674
    %v789 = vpack.c.b16 %v681, %v675
    %v790 = vpack.c.b16 %v682, %v676
    %v791 = vpack.c.b16 %v683, %v677
    %v792 = vpack.c.b16 %v684, %v678
    %v793 = vpack.c.b16 %v691, %v685
    %v794 = vpack.c.b16 %v692, %v686
    %v795 = vpack.c.b16 %v693, %v687
    %v796 = vpack.c.b16 %v694, %v688
    %v797 = vpack.c.b16 %v695, %v689
    %v798 = vpack.c.b16 %v696, %v690
    %v799 = vpack.c.b16 %v703, %v697
    %v800 = vpack.c.b16 %v704, %v698
    %v801 = vpack.c.b16 %v705, %v699
    %v802 = vpack.c.b16 %v706, %v700
    %v803 = vpack.c.b16 %v707, %v701
    %v804 = vpack.c.b16 %v708, %v702
    %v805 = vpack.c.b16 %v715, %v709
    %v806 = vpack.c.b16 %v716, %v710
    %v807 = vpack.c.b16 %v717, %v711
    %v808 = vpack.c.b16 %v718, %v712
    %v809 = vpack.c.b16 %v719, %v713
    %v810 = vpack.c.b16 %v720, %v714
    %v811 = vpack.c.b16 %v727, %v721
    %v812 = vpack.c.b16 %v728, %v722
    %v813 = vpack.c.b16 %v729, %v723
    %v814 = vpack.c.b16 %v730, %v724
    %v815 = vpack.c.b16 %v731, %v725
    %v816 = vpack.c.b16 %v732, %v726
    %v817 = vpack.c.b16 %v739, %v733
    %v818 = vpack.c.b16 %v740, %v734
    %v819 = vpack.c.b16 %v741, %v735
    %v820 = vpack.c.b16 %v742, %v736
    %v821 = vpack.c.b16 %v743, %v737
    %v822 = vpack.c.b16 %v744, %v738
    %v823 = vpack.c.b16 %v751, %v745
    %v824 = vpack.c.b16 %v752, %v746
    %v825 = vpack.c.b16 %v753, %v747
    %v826 = vpack.c.b16 %v754, %v748
    %v827 = vpack.c.b16 %v755, %v749
    %v828 = vpack.c.b16 %v756, %v750
    %vm889 = vcmask 654336
    %v891 = vsel %vm889, %v762, 0
    %v894 = vsel %vm889, %v768, 0
    %v897 = vsel %vm889, %v774, 0
    %v900 = vsel %vm889, %v780, 0
    %v903 = vsel %vm889, %v786, 0
    %v906 = vsel %vm889, %v792, 0
    %v909 = vsel %vm889, %v798, 0
    %v912 = vsel %vm889, %v804, 0
    %v915 = vsel %vm889, %v810, 0
    %v918 = vsel %vm889, %v816, 0
    %v921 = vsel %vm889, %v822, 0
    %v924 = vsel %vm889, %v828, 0
    %926 = vmatprep.subr.bf16.mxu0 %v380
    %927 = vmatpush1.bf16.msra.mxu0 %v379
    %928 = vmatprep.subr.bf16.mxu0 %v382
    %929 = vmatpush1.bf16.msra.mxu0 %v381
    %930 = vmatprep.subr.bf16.mxu0 %v384
    %931 = vmatpush1.bf16.msra.mxu0 %v383
    %932 = vmatprep.subr.bf16.mxu0 %v386
    %933 = vmatpush1.bf16.msra.mxu0 %v385
    %934 = vmatprep.subr.bf16.mxu0 %v388
    %935 = vmatpush1.bf16.msra.mxu0 %v387
    %936 = vmatprep.subr.bf16.mxu0 %v390
    %937 = vmatpush1.bf16.msra.mxu0 %v389
    %938 = vmatprep.subr.bf16.mxu0 %v392
    %939 = vmatpush1.bf16.msra.mxu0 %v391
    %940 = vmatprep.subr.bf16.mxu0 %v394
    %941 = vmatpush1.bf16.msra.mxu0 %v393
    %942 = vmatprep.subr.bf16.mxu0 %v396
    %943 = vmatpush1.bf16.msra.mxu0 %v395
    %944 = vmatprep.subr.bf16.mxu0 %v398
    %945 = vmatpush1.bf16.msra.mxu0 %v397
    %946 = vmatprep.subr.bf16.mxu0 %v400
    %947 = vmatpush1.bf16.msra.mxu0 %v399
    %948 = vmatprep.subr.bf16.mxu0 %v402
    %949 = vmatpush1.bf16.msra.mxu0 %v401
    %950 = vmatprep.subr.bf16.mxu0 %v404
    %951 = vmatpush1.bf16.msra.mxu0 %v403
    %952 = vmatprep.subr.bf16.mxu0 %v406
    %953 = vmatpush1.bf16.msra.mxu0 %v405
    %954 = vmatprep.subr.bf16.mxu0 %v408
    %955 = vmatpush1.bf16.msra.mxu0 %v407
    %956 = vmatprep.subr.bf16.mxu0 %v410
    %957 = vmatpush1.bf16.msra.mxu0 %v409
    %958 = vmatprep.mubr.bf16.mxu0 %v758
    %959 = vmatmul.mubr.bf16.gmra.mrb[0].mxu0 %v757
    %v960 = vpop.f32.mrb[0].mxu0
    %v961 = vadd.f32 0.0, %v960
    %v962 = vpop.f32.mrb[0].mxu0
    %v963 = vadd.f32 0.0, %v962
    %v964 = vpop.f32.mrb[0].mxu0
    %v965 = vadd.f32 0.0, %v964
    %v966 = vpop.f32.mrb[0].mxu0
    %v967 = vadd.f32 0.0, %v966
    %968 = vmatprep.mubr.bf16.mxu0 %v764
    %969 = vmatmul.mubr.bf16.gmra.mrb[0].mxu0 %v763
    %v970 = vpop.f32.mrb[0].mxu0
    %v971 = vadd.f32 0.0, %v970
    %v972 = vpop.f32.mrb[0].mxu0
    %v973 = vadd.f32 0.0, %v972
    %v974 = vpop.f32.mrb[0].mxu0
    %v975 = vadd.f32 0.0, %v974
    %v976 = vpop.f32.mrb[0].mxu0
    %v977 = vadd.f32 0.0, %v976
    %978 = vmatprep.mubr.bf16.mxu0 %v770
    %979 = vmatmul.mubr.bf16.gmra.mrb[0].mxu0 %v769
    %v980 = vpop.f32.mrb[0].mxu0
    %v981 = vadd.f32 0.0, %v980
    %v982 = vpop.f32.mrb[0].mxu0
    %v983 = vadd.f32 0.0, %v982
    %v984 = vpop.f32.mrb[0].mxu0
    %v985 = vadd.f32 0.0, %v984
    %v986 = vpop.f32.mrb[0].mxu0
    %v987 = vadd.f32 0.0, %v986
    %988 = vmatprep.mubr.bf16.mxu0 %v776
    %989 = vmatmul.mubr.bf16.gmra.mrb[0].mxu0 %v775
    %v990 = vpop.f32.mrb[0].mxu0
    %v991 = vadd.f32 0.0, %v990
    %v992 = vpop.f32.mrb[0].mxu0
    %v993 = vadd.f32 0.0, %v992
    %v994 = vpop.f32.mrb[0].mxu0
    %v995 = vadd.f32 0.0, %v994
    %v996 = vpop.f32.mrb[0].mxu0
    %v997 = vadd.f32 0.0, %v996
    %998 = vmatprep.mubr.bf16.mxu0 %v782
    %999 = vmatmul.mubr.bf16.gmra.mrb[0].mxu0 %v781
    %v1000 = vpop.f32.mrb[0].mxu0
    %v1001 = vadd.f32 0.0, %v1000
    %v1002 = vpop.f32.mrb[0].mxu0
    %v1003 = vadd.f32 0.0, %v1002
    %v1004 = vpop.f32.mrb[0].mxu0
    %v1005 = vadd.f32 0.0, %v1004
    %v1006 = vpop.f32.mrb[0].mxu0
    %v1007 = vadd.f32 0.0, %v1006
    %1008 = vmatprep.mubr.bf16.mxu0 %v788
    %1009 = vmatmul.mubr.bf16.gmra.mrb[0].mxu0 %v787
    %v1010 = vpop.f32.mrb[0].mxu0
    %v1011 = vadd.f32 0.0, %v1010
    %v1012 = vpop.f32.mrb[0].mxu0
    %v1013 = vadd.f32 0.0, %v1012
    %v1014 = vpop.f32.mrb[0].mxu0
    %v1015 = vadd.f32 0.0, %v1014
    %v1016 = vpop.f32.mrb[0].mxu0
    %v1017 = vadd.f32 0.0, %v1016
    %1018 = vmatprep.mubr.bf16.mxu0 %v794
    %1019 = vmatmul.mubr.bf16.gmra.mrb[0].mxu0 %v793
    %v1020 = vpop.f32.mrb[0].mxu0
    %v1021 = vadd.f32 0.0, %v1020
    %v1022 = vpop.f32.mrb[0].mxu0
    %v1023 = vadd.f32 0.0, %v1022
    %v1024 = vpop.f32.mrb[0].mxu0
    %v1025 = vadd.f32 0.0, %v1024
    %v1026 = vpop.f32.mrb[0].mxu0
    %v1027 = vadd.f32 0.0, %v1026
    %1028 = vmatprep.mubr.bf16.mxu0 %v800
    %1029 = vmatmul.mubr.bf16.gmra.mrb[0].mxu0 %v799
    %v1030 = vpop.f32.mrb[0].mxu0
    %v1031 = vadd.f32 0.0, %v1030
    %v1032 = vpop.f32.mrb[0].mxu0
    %v1033 = vadd.f32 0.0, %v1032
    %v1034 = vpop.f32.mrb[0].mxu0
    %v1035 = vadd.f32 0.0, %v1034
    %v1036 = vpop.f32.mrb[0].mxu0
    %v1037 = vadd.f32 0.0, %v1036
    %1038 = vmatprep.mubr.bf16.mxu0 %v806
    %1039 = vmatmul.mubr.bf16.gmra.mrb[0].mxu0 %v805
    %v1040 = vpop.f32.mrb[0].mxu0
    %v1041 = vadd.f32 0.0, %v1040
    %v1042 = vpop.f32.mrb[0].mxu0
    %v1043 = vadd.f32 0.0, %v1042
    %v1044 = vpop.f32.mrb[0].mxu0
    %v1045 = vadd.f32 0.0, %v1044
    %v1046 = vpop.f32.mrb[0].mxu0
    %v1047 = vadd.f32 0.0, %v1046
    %1048 = vmatprep.mubr.bf16.mxu0 %v812
    %1049 = vmatmul.mubr.bf16.gmra.mrb[0].mxu0 %v811
    %v1050 = vpop.f32.mrb[0].mxu0
    %v1051 = vadd.f32 0.0, %v1050
    %v1052 = vpop.f32.mrb[0].mxu0
    %v1053 = vadd.f32 0.0, %v1052
    %v1054 = vpop.f32.mrb[0].mxu0
    %v1055 = vadd.f32 0.0, %v1054
    %v1056 = vpop.f32.mrb[0].mxu0
    %v1057 = vadd.f32 0.0, %v1056
    %1058 = vmatprep.mubr.bf16.mxu0 %v818
    %1059 = vmatmul.mubr.bf16.gmra.mrb[0].mxu0 %v817
    %v1060 = vpop.f32.mrb[0].mxu0
    %v1061 = vadd.f32 0.0, %v1060
    %v1062 = vpop.f32.mrb[0].mxu0
    %v1063 = vadd.f32 0.0, %v1062
    %v1064 = vpop.f32.mrb[0].mxu0
    %v1065 = vadd.f32 0.0, %v1064
    %v1066 = vpop.f32.mrb[0].mxu0
    %v1067 = vadd.f32 0.0, %v1066
    %1068 = vmatprep.mubr.bf16.mxu0 %v824
    %1069 = vmatmul.mubr.bf16.gmra.mrb[0].mxu0 %v823
    %v1070 = vpop.f32.mrb[0].mxu0
    %v1071 = vadd.f32 0.0, %v1070
    %v1072 = vpop.f32.mrb[0].mxu0
    %v1073 = vadd.f32 0.0, %v1072
    %v1074 = vpop.f32.mrb[0].mxu0
    %v1075 = vadd.f32 0.0, %v1074
    %v1076 = vpop.f32.mrb[0].mxu0
    %v1077 = vadd.f32 0.0, %v1076
    %1078 = vdwg.mxu0
    %1079 = vmatprep.subr.bf16.mxu0 %v412
    %1080 = vmatpush1.bf16.msra.mxu0 %v411
    %1081 = vmatprep.subr.bf16.mxu0 %v414
    %1082 = vmatpush1.bf16.msra.mxu0 %v413
    %1083 = vmatprep.subr.bf16.mxu0 %v416
    %1084 = vmatpush1.bf16.msra.mxu0 %v415
    %1085 = vmatprep.subr.bf16.mxu0 %v418
    %1086 = vmatpush1.bf16.msra.mxu0 %v417
    %1087 = vmatprep.subr.bf16.mxu0 %v420
    %1088 = vmatpush1.bf16.msra.mxu0 %v419
    %1089 = vmatprep.subr.bf16.mxu0 %v422
    %1090 = vmatpush1.bf16.msra.mxu0 %v421
    %1091 = vmatprep.subr.bf16.mxu0 %v424
    %1092 = vmatpush1.bf16.msra.mxu0 %v423
    %1093 = vmatprep.subr.bf16.mxu0 %v426
    %1094 = vmatpush1.bf16.msra.mxu0 %v425
    %1095 = vmatprep.subr.bf16.mxu0 %v428
    %1096 = vmatpush1.bf16.msra.mxu0 %v427
    %1097 = vmatprep.subr.bf16.mxu0 %v430
    %1098 = vmatpush1.bf16.msra.mxu0 %v429
    %1099 = vmatprep.subr.bf16.mxu0 %v432
    %1100 = vmatpush1.bf16.msra.mxu0 %v431
    %1101 = vmatprep.subr.bf16.mxu0 %v434
    %1102 = vmatpush1.bf16.msra.mxu0 %v433
    %1103 = vmatprep.subr.bf16.mxu0 %v436
    %1104 = vmatpush1.bf16.msra.mxu0 %v435
    %1105 = vmatprep.subr.bf16.mxu0 %v438
    %1106 = vmatpush1.bf16.msra.mxu0 %v437
    %1107 = vmatprep.subr.bf16.mxu0 %v440
    %1108 = vmatpush1.bf16.msra.mxu0 %v439
    %1109 = vmatprep.subr.bf16.mxu0 %v442
    %1110 = vmatpush1.bf16.msra.mxu0 %v441
    %1111 = vmatprep.mubr.bf16.mxu0 %v760
    %1112 = vmatmul.mubr.bf16.gmra.mrb[0].mxu0 %v759
    %v1113 = vpop.f32.mrb[0].mxu0
    %v1114 = vadd.f32 %v961, %v1113
    %v1115 = vpop.f32.mrb[0].mxu0
    %v1116 = vadd.f32 %v963, %v1115
    %v1117 = vpop.f32.mrb[0].mxu0
    %v1118 = vadd.f32 %v965, %v1117
    %v1119 = vpop.f32.mrb[0].mxu0
    %v1120 = vadd.f32 %v967, %v1119
    %1121 = vmatprep.mubr.bf16.mxu0 %v766
    %1122 = vmatmul.mubr.bf16.gmra.mrb[0].mxu0 %v765
    %v1123 = vpop.f32.mrb[0].mxu0
    %v1124 = vadd.f32 %v971, %v1123
    %v1125 = vpop.f32.mrb[0].mxu0
    %v1126 = vadd.f32 %v973, %v1125
    %v1127 = vpop.f32.mrb[0].mxu0
    %v1128 = vadd.f32 %v975, %v1127
    %v1129 = vpop.f32.mrb[0].mxu0
    %v1130 = vadd.f32 %v977, %v1129
    %1131 = vmatprep.mubr.bf16.mxu0 %v772
    %1132 = vmatmul.mubr.bf16.gmra.mrb[0].mxu0 %v771
    %v1133 = vpop.f32.mrb[0].mxu0
    %v1134 = vadd.f32 %v981, %v1133
    %v1135 = vpop.f32.mrb[0].mxu0
    %v1136 = vadd.f32 %v983, %v1135
    %v1137 = vpop.f32.mrb[0].mxu0
    %v1138 = vadd.f32 %v985, %v1137
    %v1139 = vpop.f32.mrb[0].mxu0
    %v1140 = vadd.f32 %v987, %v1139
    %1141 = vmatprep.mubr.bf16.mxu0 %v778
    %1142 = vmatmul.mubr.bf16.gmra.mrb[0].mxu0 %v777
    %v1143 = vpop.f32.mrb[0].mxu0
    %v1144 = vadd.f32 %v991, %v1143
    %v1145 = vpop.f32.mrb[0].mxu0
    %v1146 = vadd.f32 %v993, %v1145
    %v1147 = vpop.f32.mrb[0].mxu0
    %v1148 = vadd.f32 %v995, %v1147
    %v1149 = vpop.f32.mrb[0].mxu0
    %v1150 = vadd.f32 %v997, %v1149
    %1151 = vmatprep.mubr.bf16.mxu0 %v784
    %1152 = vmatmul.mubr.bf16.gmra.mrb[0].mxu0 %v783
    %v1153 = vpop.f32.mrb[0].mxu0
    %v1154 = vadd.f32 %v1001, %v1153
    %v1155 = vpop.f32.mrb[0].mxu0
    %v1156 = vadd.f32 %v1003, %v1155
    %v1157 = vpop.f32.mrb[0].mxu0
    %v1158 = vadd.f32 %v1005, %v1157
    %v1159 = vpop.f32.mrb[0].mxu0
    %v1160 = vadd.f32 %v1007, %v1159
    %1161 = vmatprep.mubr.bf16.mxu0 %v790
    %1162 = vmatmul.mubr.bf16.gmra.mrb[0].mxu0 %v789
    %v1163 = vpop.f32.mrb[0].mxu0
    %v1164 = vadd.f32 %v1011, %v1163
    %v1165 = vpop.f32.mrb[0].mxu0
    %v1166 = vadd.f32 %v1013, %v1165
    %v1167 = vpop.f32.mrb[0].mxu0
    %v1168 = vadd.f32 %v1015, %v1167
    %v1169 = vpop.f32.mrb[0].mxu0
    %v1170 = vadd.f32 %v1017, %v1169
    %1171 = vmatprep.mubr.bf16.mxu0 %v796
    %1172 = vmatmul.mubr.bf16.gmra.mrb[0].mxu0 %v795
    %v1173 = vpop.f32.mrb[0].mxu0
    %v1174 = vadd.f32 %v1021, %v1173
    %v1175 = vpop.f32.mrb[0].mxu0
    %v1176 = vadd.f32 %v1023, %v1175
    %v1177 = vpop.f32.mrb[0].mxu0
    %v1178 = vadd.f32 %v1025, %v1177
    %v1179 = vpop.f32.mrb[0].mxu0
    %v1180 = vadd.f32 %v1027, %v1179
    %1181 = vmatprep.mubr.bf16.mxu0 %v802
    %1182 = vmatmul.mubr.bf16.gmra.mrb[0].mxu0 %v801
    %v1183 = vpop.f32.mrb[0].mxu0
    %v1184 = vadd.f32 %v1031, %v1183
    %v1185 = vpop.f32.mrb[0].mxu0
    %v1186 = vadd.f32 %v1033, %v1185
    %v1187 = vpop.f32.mrb[0].mxu0
    %v1188 = vadd.f32 %v1035, %v1187
    %v1189 = vpop.f32.mrb[0].mxu0
    %v1190 = vadd.f32 %v1037, %v1189
    %1191 = vmatprep.mubr.bf16.mxu0 %v808
    %1192 = vmatmul.mubr.bf16.gmra.mrb[0].mxu0 %v807
    %v1193 = vpop.f32.mrb[0].mxu0
    %v1194 = vadd.f32 %v1041, %v1193
    %v1195 = vpop.f32.mrb[0].mxu0
    %v1196 = vadd.f32 %v1043, %v1195
    %v1197 = vpop.f32.mrb[0].mxu0
    %v1198 = vadd.f32 %v1045, %v1197
    %v1199 = vpop.f32.mrb[0].mxu0
    %v1200 = vadd.f32 %v1047, %v1199
    %1201 = vmatprep.mubr.bf16.mxu0 %v814
    %1202 = vmatmul.mubr.bf16.gmra.mrb[0].mxu0 %v813
    %v1203 = vpop.f32.mrb[0].mxu0
    %v1204 = vadd.f32 %v1051, %v1203
    %v1205 = vpop.f32.mrb[0].mxu0
    %v1206 = vadd.f32 %v1053, %v1205
    %v1207 = vpop.f32.mrb[0].mxu0
    %v1208 = vadd.f32 %v1055, %v1207
    %v1209 = vpop.f32.mrb[0].mxu0
    %v1210 = vadd.f32 %v1057, %v1209
    %1211 = vmatprep.mubr.bf16.mxu0 %v820
    %1212 = vmatmul.mubr.bf16.gmra.mrb[0].mxu0 %v819
    %v1213 = vpop.f32.mrb[0].mxu0
    %v1214 = vadd.f32 %v1061, %v1213
    %v1215 = vpop.f32.mrb[0].mxu0
    %v1216 = vadd.f32 %v1063, %v1215
    %v1217 = vpop.f32.mrb[0].mxu0
    %v1218 = vadd.f32 %v1065, %v1217
    %v1219 = vpop.f32.mrb[0].mxu0
    %v1220 = vadd.f32 %v1067, %v1219
    %1221 = vmatprep.mubr.bf16.mxu0 %v826
    %1222 = vmatmul.mubr.bf16.gmra.mrb[0].mxu0 %v825
    %v1223 = vpop.f32.mrb[0].mxu0
    %v1224 = vadd.f32 %v1071, %v1223
    %v1225 = vpop.f32.mrb[0].mxu0
    %v1226 = vadd.f32 %v1073, %v1225
    %v1227 = vpop.f32.mrb[0].mxu0
    %v1228 = vadd.f32 %v1075, %v1227
    %v1229 = vpop.f32.mrb[0].mxu0
    %v1230 = vadd.f32 %v1077, %v1229
    %1231 = vdwg.mxu0
    %1232 = vmatprep.subr.bf16.mxu0 %v444
    %1233 = vmatpush1.bf16.msra.mxu0 %v443
    %1234 = vmatprep.subr.bf16.mxu0 %v446
    %1235 = vmatpush1.bf16.msra.mxu0 %v445
    %1236 = vmatprep.subr.bf16.mxu0 %v448
    %1237 = vmatpush1.bf16.msra.mxu0 %v447
    %1238 = vmatprep.subr.bf16.mxu0 %v450
    %1239 = vmatpush1.bf16.msra.mxu0 %v449
    %1240 = vmatprep.subr.bf16.mxu0 %v452
    %1241 = vmatpush1.bf16.msra.mxu0 %v451
    %1242 = vmatprep.subr.bf16.mxu0 %v454
    %1243 = vmatpush1.bf16.msra.mxu0 %v453
    %1244 = vmatprep.subr.bf16.mxu0 %v456
    %1245 = vmatpush1.bf16.msra.mxu0 %v455
    %1246 = vmatprep.subr.bf16.mxu0 %v458
    %1247 = vmatpush1.bf16.msra.mxu0 %v457
    %1248 = vmatprep.subr.bf16.mxu0 %v460
    %1249 = vmatpush1.bf16.msra.mxu0 %v459
    %1250 = vmatprep.subr.bf16.mxu0 %v462
    %1251 = vmatpush1.bf16.msra.mxu0 %v461
    %1252 = vmatprep.subr.bf16.mxu0 %v464
    %1253 = vmatpush1.bf16.msra.mxu0 %v463
    %1254 = vmatprep.subr.bf16.mxu0 %v466
    %1255 = vmatpush1.bf16.msra.mxu0 %v465
    %1256 = vmatprep.subr.bf16.mxu0 %v468
    %1257 = vmatpush1.bf16.msra.mxu0 %v467
    %1258 = vmatprep.subr.bf16.mxu0 0
    %1259 = vmatpush1.bf16.msra.mxu0 0
    %1260 = vmatprep.subr.bf16.mxu0 0
    %1261 = vmatpush1.bf16.msra.mxu0 0
    %1262 = vmatprep.subr.bf16.mxu0 0
    %1263 = vmatpush1.bf16.msra.mxu0 0
    %1264 = vmatprep.mubr.bf16.mxu0 %v891
    %1265 = vmatmul.mubr.bf16.gmra.mrb[0].mxu0 %v761
    %v1266 = vpop.f32.mrb[0].mxu0
    %v1267 = vadd.f32 %v1114, %v1266
    %v1268 = vpop.f32.mrb[0].mxu0
    %v1269 = vadd.f32 %v1116, %v1268
    %v1270 = vpop.f32.mrb[0].mxu0
    %v1271 = vadd.f32 %v1118, %v1270
    %v1272 = vpop.f32.mrb[0].mxu0
    %v1273 = vadd.f32 %v1120, %v1272
    %1274 = vmatprep.mubr.bf16.mxu0 %v894
    %1275 = vmatmul.mubr.bf16.gmra.mrb[0].mxu0 %v767
    %v1276 = vpop.f32.mrb[0].mxu0
    %v1277 = vadd.f32 %v1124, %v1276
    %v1278 = vpop.f32.mrb[0].mxu0
    %v1279 = vadd.f32 %v1126, %v1278
    %v1280 = vpop.f32.mrb[0].mxu0
    %v1281 = vadd.f32 %v1128, %v1280
    %v1282 = vpop.f32.mrb[0].mxu0
    %v1283 = vadd.f32 %v1130, %v1282
    %1284 = vmatprep.mubr.bf16.mxu0 %v897
    %1285 = vmatmul.mubr.bf16.gmra.mrb[0].mxu0 %v773
    %v1286 = vpop.f32.mrb[0].mxu0
    %v1287 = vadd.f32 %v1134, %v1286
    %v1288 = vpop.f32.mrb[0].mxu0
    %v1289 = vadd.f32 %v1136, %v1288
    %v1290 = vpop.f32.mrb[0].mxu0
    %v1291 = vadd.f32 %v1138, %v1290
    %v1292 = vpop.f32.mrb[0].mxu0
    %v1293 = vadd.f32 %v1140, %v1292
    %1294 = vmatprep.mubr.bf16.mxu0 %v900
    %1295 = vmatmul.mubr.bf16.gmra.mrb[0].mxu0 %v779
    %v1296 = vpop.f32.mrb[0].mxu0
    %v1297 = vadd.f32 %v1144, %v1296
    %v1298 = vpop.f32.mrb[0].mxu0
    %v1299 = vadd.f32 %v1146, %v1298
    %v1300 = vpop.f32.mrb[0].mxu0
    %v1301 = vadd.f32 %v1148, %v1300
    %v1302 = vpop.f32.mrb[0].mxu0
    %v1303 = vadd.f32 %v1150, %v1302
    %1304 = vmatprep.mubr.bf16.mxu0 %v903
    %1305 = vmatmul.mubr.bf16.gmra.mrb[0].mxu0 %v785
    %v1306 = vpop.f32.mrb[0].mxu0
    %v1307 = vadd.f32 %v1154, %v1306
    %v1308 = vpop.f32.mrb[0].mxu0
    %v1309 = vadd.f32 %v1156, %v1308
    %v1310 = vpop.f32.mrb[0].mxu0
    %v1311 = vadd.f32 %v1158, %v1310
    %v1312 = vpop.f32.mrb[0].mxu0
    %v1313 = vadd.f32 %v1160, %v1312
    %1314 = vmatprep.mubr.bf16.mxu0 %v906
    %1315 = vmatmul.mubr.bf16.gmra.mrb[0].mxu0 %v791
    %v1316 = vpop.f32.mrb[0].mxu0
    %v1317 = vadd.f32 %v1164, %v1316
    %v1318 = vpop.f32.mrb[0].mxu0
    %v1319 = vadd.f32 %v1166, %v1318
    %v1320 = vpop.f32.mrb[0].mxu0
    %v1321 = vadd.f32 %v1168, %v1320
    %v1322 = vpop.f32.mrb[0].mxu0
    %v1323 = vadd.f32 %v1170, %v1322
    %1324 = vmatprep.mubr.bf16.mxu0 %v909
    %1325 = vmatmul.mubr.bf16.gmra.mrb[0].mxu0 %v797
    %v1326 = vpop.f32.mrb[0].mxu0
    %v1327 = vadd.f32 %v1174, %v1326
    %v1328 = vpop.f32.mrb[0].mxu0
    %v1329 = vadd.f32 %v1176, %v1328
    %v1330 = vpop.f32.mrb[0].mxu0
    %v1331 = vadd.f32 %v1178, %v1330
    %v1332 = vpop.f32.mrb[0].mxu0
    %v1333 = vadd.f32 %v1180, %v1332
    %1334 = vmatprep.mubr.bf16.mxu0 %v912
    %1335 = vmatmul.mubr.bf16.gmra.mrb[0].mxu0 %v803
    %v1336 = vpop.f32.mrb[0].mxu0
    %v1337 = vadd.f32 %v1184, %v1336
    %v1338 = vpop.f32.mrb[0].mxu0
    %v1339 = vadd.f32 %v1186, %v1338
    %v1340 = vpop.f32.mrb[0].mxu0
    %v1341 = vadd.f32 %v1188, %v1340
    %v1342 = vpop.f32.mrb[0].mxu0
    %v1343 = vadd.f32 %v1190, %v1342
    %1344 = vmatprep.mubr.bf16.mxu0 %v915
    %1345 = vmatmul.mubr.bf16.gmra.mrb[0].mxu0 %v809
    %v1346 = vpop.f32.mrb[0].mxu0
    %v1347 = vadd.f32 %v1194, %v1346
    %v1348 = vpop.f32.mrb[0].mxu0
    %v1349 = vadd.f32 %v1196, %v1348
    %v1350 = vpop.f32.mrb[0].mxu0
    %v1351 = vadd.f32 %v1198, %v1350
    %v1352 = vpop.f32.mrb[0].mxu0
    %v1353 = vadd.f32 %v1200, %v1352
    %1354 = vmatprep.mubr.bf16.mxu0 %v918
    %1355 = vmatmul.mubr.bf16.gmra.mrb[0].mxu0 %v815
    %v1356 = vpop.f32.mrb[0].mxu0
    %v1357 = vadd.f32 %v1204, %v1356
    %v1358 = vpop.f32.mrb[0].mxu0
    %v1359 = vadd.f32 %v1206, %v1358
    %v1360 = vpop.f32.mrb[0].mxu0
    %v1361 = vadd.f32 %v1208, %v1360
    %v1362 = vpop.f32.mrb[0].mxu0
    %v1363 = vadd.f32 %v1210, %v1362
    %1364 = vmatprep.mubr.bf16.mxu0 %v921
    %1365 = vmatmul.mubr.bf16.gmra.mrb[0].mxu0 %v821
    %v1366 = vpop.f32.mrb[0].mxu0
    %v1367 = vadd.f32 %v1214, %v1366
    %v1368 = vpop.f32.mrb[0].mxu0
    %v1369 = vadd.f32 %v1216, %v1368
    %v1370 = vpop.f32.mrb[0].mxu0
    %v1371 = vadd.f32 %v1218, %v1370
    %v1372 = vpop.f32.mrb[0].mxu0
    %v1373 = vadd.f32 %v1220, %v1372
    %1374 = vmatprep.mubr.bf16.mxu0 %v924
    %1375 = vmatmul.mubr.bf16.gmra.mrb[0].mxu0 %v827
    %v1376 = vpop.f32.mrb[0].mxu0
    %v1377 = vadd.f32 %v1224, %v1376
    %v1378 = vpop.f32.mrb[0].mxu0
    %v1379 = vadd.f32 %v1226, %v1378
    %v1380 = vpop.f32.mrb[0].mxu0
    %v1381 = vadd.f32 %v1228, %v1380
    %v1382 = vpop.f32.mrb[0].mxu0
    %v1383 = vadd.f32 %v1230, %v1382
    %1384 = vdwg.mxu0
    %vm1385 = vcmask 556032
    %v1386 = vsel %vm1385, %v1269, 0.0
    %v1387 = vadd.f32 %v1267, %v1386
    %1388 = vadd.xlane.f32.xlu0 %v1387
    %v1389 = vpop.xlane.xlu0 %1388
    %v1390 = vsel %vm1385, %v1273, 0.0
    %v1391 = vadd.f32 %v1271, %v1390
    %1392 = vadd.xlane.f32.xlu0 %v1391
    %v1393 = vpop.xlane.xlu0 %1392
    %v1394 = vsel %vm1385, %v1279, 0.0
    %v1395 = vadd.f32 %v1277, %v1394
    %1396 = vadd.xlane.f32.xlu0 %v1395
    %v1397 = vpop.xlane.xlu0 %1396
    %v1398 = vsel %vm1385, %v1283, 0.0
    %v1399 = vadd.f32 %v1281, %v1398
    %1400 = vadd.xlane.f32.xlu0 %v1399
    %v1401 = vpop.xlane.xlu0 %1400
    %v1402 = vsel %vm1385, %v1289, 0.0
    %v1403 = vadd.f32 %v1287, %v1402
    %1404 = vadd.xlane.f32.xlu0 %v1403
    %v1405 = vpop.xlane.xlu0 %1404
    %v1406 = vsel %vm1385, %v1293, 0.0
    %v1407 = vadd.f32 %v1291, %v1406
    %1408 = vadd.xlane.f32.xlu0 %v1407
    %v1409 = vpop.xlane.xlu0 %1408
    %v1410 = vsel %vm1385, %v1299, 0.0
    %v1411 = vadd.f32 %v1297, %v1410
    %1412 = vadd.xlane.f32.xlu0 %v1411
    %v1413 = vpop.xlane.xlu0 %1412
    %v1414 = vsel %vm1385, %v1303, 0.0
    %v1415 = vadd.f32 %v1301, %v1414
    %1416 = vadd.xlane.f32.xlu0 %v1415
    %v1417 = vpop.xlane.xlu0 %1416
    %v1418 = vsel %vm1385, %v1309, 0.0
    %v1419 = vadd.f32 %v1307, %v1418
    %1420 = vadd.xlane.f32.xlu0 %v1419
    %v1421 = vpop.xlane.xlu0 %1420
    %v1422 = vsel %vm1385, %v1313, 0.0
    %v1423 = vadd.f32 %v1311, %v1422
    %1424 = vadd.xlane.f32.xlu0 %v1423
    %v1425 = vpop.xlane.xlu0 %1424
    %v1426 = vsel %vm1385, %v1319, 0.0
    %v1427 = vadd.f32 %v1317, %v1426
    %1428 = vadd.xlane.f32.xlu0 %v1427
    %v1429 = vpop.xlane.xlu0 %1428
    %v1430 = vsel %vm1385, %v1323, 0.0
    %v1431 = vadd.f32 %v1321, %v1430
    %1432 = vadd.xlane.f32.xlu0 %v1431
    %v1433 = vpop.xlane.xlu0 %1432
    %v1434 = vsel %vm1385, %v1329, 0.0
    %v1435 = vadd.f32 %v1327, %v1434
    %1436 = vadd.xlane.f32.xlu0 %v1435
    %v1437 = vpop.xlane.xlu0 %1436
    %v1438 = vsel %vm1385, %v1333, 0.0
    %v1439 = vadd.f32 %v1331, %v1438
    %1440 = vadd.xlane.f32.xlu0 %v1439
    %v1441 = vpop.xlane.xlu0 %1440
    %v1442 = vsel %vm1385, %v1339, 0.0
    %v1443 = vadd.f32 %v1337, %v1442
    %1444 = vadd.xlane.f32.xlu0 %v1443
    %v1445 = vpop.xlane.xlu0 %1444
    %v1446 = vsel %vm1385, %v1343, 0.0
    %v1447 = vadd.f32 %v1341, %v1446
    %1448 = vadd.xlane.f32.xlu0 %v1447
    %v1449 = vpop.xlane.xlu0 %1448
    %v1450 = vsel %vm1385, %v1349, 0.0
    %v1451 = vadd.f32 %v1347, %v1450
    %1452 = vadd.xlane.f32.xlu0 %v1451
    %v1453 = vpop.xlane.xlu0 %1452
    %v1454 = vsel %vm1385, %v1353, 0.0
    %v1455 = vadd.f32 %v1351, %v1454
    %1456 = vadd.xlane.f32.xlu0 %v1455
    %v1457 = vpop.xlane.xlu0 %1456
    %v1458 = vsel %vm1385, %v1359, 0.0
    %v1459 = vadd.f32 %v1357, %v1458
    %1460 = vadd.xlane.f32.xlu0 %v1459
    %v1461 = vpop.xlane.xlu0 %1460
    %v1462 = vsel %vm1385, %v1363, 0.0
    %v1463 = vadd.f32 %v1361, %v1462
    %1464 = vadd.xlane.f32.xlu0 %v1463
    %v1465 = vpop.xlane.xlu0 %1464
    %v1466 = vsel %vm1385, %v1369, 0.0
    %v1467 = vadd.f32 %v1367, %v1466
    %1468 = vadd.xlane.f32.xlu0 %v1467
    %v1469 = vpop.xlane.xlu0 %1468
    %v1470 = vsel %vm1385, %v1373, 0.0
    %v1471 = vadd.f32 %v1371, %v1470
    %1472 = vadd.xlane.f32.xlu0 %v1471
    %v1473 = vpop.xlane.xlu0 %1472
    %v1474 = vsel %vm1385, %v1379, 0.0
    %v1475 = vadd.f32 %v1377, %v1474
    %1476 = vadd.xlane.f32.xlu0 %v1475
    %v1477 = vpop.xlane.xlu0 %1476
    %v1478 = vsel %vm1385, %v1383, 0.0
    %v1479 = vadd.f32 %v1381, %v1478
    %1480 = vadd.xlane.f32.xlu0 %v1479
    %v1481 = vpop.xlane.xlu0 %1480
    %v1482 = vmul.f32 %v1267, %v1267
    %v1483 = vmul.f32 %v1269, %v1269
    %v1484 = vmul.f32 %v1271, %v1271
    %v1485 = vmul.f32 %v1273, %v1273
    %v1486 = vmul.f32 %v1277, %v1277
    %v1487 = vmul.f32 %v1279, %v1279
    %v1488 = vmul.f32 %v1281, %v1281
    %v1489 = vmul.f32 %v1283, %v1283
    %v1490 = vmul.f32 %v1287, %v1287
    %v1491 = vmul.f32 %v1289, %v1289
    %v1492 = vmul.f32 %v1291, %v1291
    %v1493 = vmul.f32 %v1293, %v1293
    %v1494 = vmul.f32 %v1297, %v1297
    %v1495 = vmul.f32 %v1299, %v1299
    %v1496 = vmul.f32 %v1301, %v1301
    %v1497 = vmul.f32 %v1303, %v1303
    %v1498 = vmul.f32 %v1307, %v1307
    %v1499 = vmul.f32 %v1309, %v1309
    %v1500 = vmul.f32 %v1311, %v1311
    %v1501 = vmul.f32 %v1313, %v1313
    %v1502 = vmul.f32 %v1317, %v1317
    %v1503 = vmul.f32 %v1319, %v1319
    %v1504 = vmul.f32 %v1321, %v1321
    %v1505 = vmul.f32 %v1323, %v1323
    %v1506 = vmul.f32 %v1327, %v1327
    %v1507 = vmul.f32 %v1329, %v1329
    %v1508 = vmul.f32 %v1331, %v1331
    %v1509 = vmul.f32 %v1333, %v1333
    %v1510 = vmul.f32 %v1337, %v1337
    %v1511 = vmul.f32 %v1339, %v1339
    %v1512 = vmul.f32 %v1341, %v1341
    %v1513 = vmul.f32 %v1343, %v1343
    %v1514 = vmul.f32 %v1347, %v1347
    %v1515 = vmul.f32 %v1349, %v1349
    %v1516 = vmul.f32 %v1351, %v1351
    %v1517 = vmul.f32 %v1353, %v1353
    %v1518 = vmul.f32 %v1357, %v1357
    %v1519 = vmul.f32 %v1359, %v1359
    %v1520 = vmul.f32 %v1361, %v1361
    %v1521 = vmul.f32 %v1363, %v1363
    %v1522 = vmul.f32 %v1367, %v1367
    %v1523 = vmul.f32 %v1369, %v1369
    %v1524 = vmul.f32 %v1371, %v1371
    %v1525 = vmul.f32 %v1373, %v1373
    %v1526 = vmul.f32 %v1377, %v1377
    %v1527 = vmul.f32 %v1379, %v1379
    %v1528 = vmul.f32 %v1381, %v1381
    %v1529 = vmul.f32 %v1383, %v1383
    %v1530 = vsel %vm1385, %v1483, 0.0
    %v1531 = vadd.f32 %v1482, %v1530
    %1532 = vadd.xlane.f32.xlu0 %v1531
    %v1533 = vpop.xlane.xlu0 %1532
    %v1534 = vsel %vm1385, %v1485, 0.0
    %v1535 = vadd.f32 %v1484, %v1534
    %1536 = vadd.xlane.f32.xlu0 %v1535
    %v1537 = vpop.xlane.xlu0 %1536
    %v1538 = vsel %vm1385, %v1487, 0.0
    %v1539 = vadd.f32 %v1486, %v1538
    %1540 = vadd.xlane.f32.xlu0 %v1539
    %v1541 = vpop.xlane.xlu0 %1540
    %v1542 = vsel %vm1385, %v1489, 0.0
    %v1543 = vadd.f32 %v1488, %v1542
    %1544 = vadd.xlane.f32.xlu0 %v1543
    %v1545 = vpop.xlane.xlu0 %1544
    %v1546 = vsel %vm1385, %v1491, 0.0
    %v1547 = vadd.f32 %v1490, %v1546
    %1548 = vadd.xlane.f32.xlu0 %v1547
    %v1549 = vpop.xlane.xlu0 %1548
    %v1550 = vsel %vm1385, %v1493, 0.0
    %v1551 = vadd.f32 %v1492, %v1550
    %1552 = vadd.xlane.f32.xlu0 %v1551
    %v1553 = vpop.xlane.xlu0 %1552
    %v1554 = vsel %vm1385, %v1495, 0.0
    %v1555 = vadd.f32 %v1494, %v1554
    %1556 = vadd.xlane.f32.xlu0 %v1555
    %v1557 = vpop.xlane.xlu0 %1556
    %v1558 = vsel %vm1385, %v1497, 0.0
    %v1559 = vadd.f32 %v1496, %v1558
    %1560 = vadd.xlane.f32.xlu0 %v1559
    %v1561 = vpop.xlane.xlu0 %1560
    %v1562 = vsel %vm1385, %v1499, 0.0
    %v1563 = vadd.f32 %v1498, %v1562
    %1564 = vadd.xlane.f32.xlu0 %v1563
    %v1565 = vpop.xlane.xlu0 %1564
    %v1566 = vsel %vm1385, %v1501, 0.0
    %v1567 = vadd.f32 %v1500, %v1566
    %1568 = vadd.xlane.f32.xlu0 %v1567
    %v1569 = vpop.xlane.xlu0 %1568
    %v1570 = vsel %vm1385, %v1503, 0.0
    %v1571 = vadd.f32 %v1502, %v1570
    %1572 = vadd.xlane.f32.xlu0 %v1571
    %v1573 = vpop.xlane.xlu0 %1572
    %v1574 = vsel %vm1385, %v1505, 0.0
    %v1575 = vadd.f32 %v1504, %v1574
    %1576 = vadd.xlane.f32.xlu0 %v1575
    %v1577 = vpop.xlane.xlu0 %1576
    %v1578 = vsel %vm1385, %v1507, 0.0
    %v1579 = vadd.f32 %v1506, %v1578
    %1580 = vadd.xlane.f32.xlu0 %v1579
    %v1581 = vpop.xlane.xlu0 %1580
    %v1582 = vsel %vm1385, %v1509, 0.0
    %v1583 = vadd.f32 %v1508, %v1582
    %1584 = vadd.xlane.f32.xlu0 %v1583
    %v1585 = vpop.xlane.xlu0 %1584
    %v1586 = vsel %vm1385, %v1511, 0.0
    %v1587 = vadd.f32 %v1510, %v1586
    %1588 = vadd.xlane.f32.xlu0 %v1587
    %v1589 = vpop.xlane.xlu0 %1588
    %v1590 = vsel %vm1385, %v1513, 0.0
    %v1591 = vadd.f32 %v1512, %v1590
    %1592 = vadd.xlane.f32.xlu0 %v1591
    %v1593 = vpop.xlane.xlu0 %1592
    %v1594 = vsel %vm1385, %v1515, 0.0
    %v1595 = vadd.f32 %v1514, %v1594
    %1596 = vadd.xlane.f32.xlu0 %v1595
    %v1597 = vpop.xlane.xlu0 %1596
    %v1598 = vsel %vm1385, %v1517, 0.0
    %v1599 = vadd.f32 %v1516, %v1598
    %1600 = vadd.xlane.f32.xlu0 %v1599
    %v1601 = vpop.xlane.xlu0 %1600
    %v1602 = vsel %vm1385, %v1519, 0.0
    %v1603 = vadd.f32 %v1518, %v1602
    %1604 = vadd.xlane.f32.xlu0 %v1603
    %v1605 = vpop.xlane.xlu0 %1604
    %v1606 = vsel %vm1385, %v1521, 0.0
    %v1607 = vadd.f32 %v1520, %v1606
    %1608 = vadd.xlane.f32.xlu0 %v1607
    %v1609 = vpop.xlane.xlu0 %1608
    %v1610 = vsel %vm1385, %v1523, 0.0
    %v1611 = vadd.f32 %v1522, %v1610
    %1612 = vadd.xlane.f32.xlu0 %v1611
    %v1613 = vpop.xlane.xlu0 %1612
    %v1614 = vsel %vm1385, %v1525, 0.0
    %v1615 = vadd.f32 %v1524, %v1614
    %1616 = vadd.xlane.f32.xlu0 %v1615
    %v1617 = vpop.xlane.xlu0 %1616
    %v1618 = vsel %vm1385, %v1527, 0.0
    %v1619 = vadd.f32 %v1526, %v1618
    %1620 = vadd.xlane.f32.xlu0 %v1619
    %v1621 = vpop.xlane.xlu0 %1620
    %v1622 = vsel %vm1385, %v1529, 0.0
    %v1623 = vadd.f32 %v1528, %v1622
    %1624 = vadd.xlane.f32.xlu0 %v1623
    %v1625 = vpop.xlane.xlu0 %1624
    %v1626 = vmul.f32 %v1389, 0.0051020407
    %v1627 = vmul.f32 %v1393, 0.0051020407
    %v1628 = vmul.f32 %v1397, 0.0051020407
    %v1629 = vmul.f32 %v1401, 0.0051020407
    %v1630 = vmul.f32 %v1405, 0.0051020407
    %v1631 = vmul.f32 %v1409, 0.0051020407
    %v1632 = vmul.f32 %v1413, 0.0051020407
    %v1633 = vmul.f32 %v1417, 0.0051020407
    %v1634 = vmul.f32 %v1421, 0.0051020407
    %v1635 = vmul.f32 %v1425, 0.0051020407
    %v1636 = vmul.f32 %v1429, 0.0051020407
    %v1637 = vmul.f32 %v1433, 0.0051020407
    %v1638 = vmul.f32 %v1437, 0.0051020407
    %v1639 = vmul.f32 %v1441, 0.0051020407
    %v1640 = vmul.f32 %v1445, 0.0051020407
    %v1641 = vmul.f32 %v1449, 0.0051020407
    %v1642 = vmul.f32 %v1453, 0.0051020407
    %v1643 = vmul.f32 %v1457, 0.0051020407
    %v1644 = vmul.f32 %v1461, 0.0051020407
    %v1645 = vmul.f32 %v1465, 0.0051020407
    %v1646 = vmul.f32 %v1469, 0.0051020407
    %v1647 = vmul.f32 %v1473, 0.0051020407
    %v1648 = vmul.f32 %v1477, 0.0051020407
    %v1649 = vmul.f32 %v1481, 0.0051020407
    %v1650 = vmul.f32 %v1533, 0.0051020407
    %v1651 = vmul.f32 %v1537, 0.0051020407
    %v1652 = vmul.f32 %v1541, 0.0051020407
    %v1653 = vmul.f32 %v1545, 0.0051020407
    %v1654 = vmul.f32 %v1549, 0.0051020407
    %v1655 = vmul.f32 %v1553, 0.0051020407
    %v1656 = vmul.f32 %v1557, 0.0051020407
    %v1657 = vmul.f32 %v1561, 0.0051020407
    %v1658 = vmul.f32 %v1565, 0.0051020407
    %v1659 = vmul.f32 %v1569, 0.0051020407
    %v1660 = vmul.f32 %v1573, 0.0051020407
    %v1661 = vmul.f32 %v1577, 0.0051020407
    %v1662 = vmul.f32 %v1581, 0.0051020407
    %v1663 = vmul.f32 %v1585, 0.0051020407
    %v1664 = vmul.f32 %v1589, 0.0051020407
    %v1665 = vmul.f32 %v1593, 0.0051020407
    %v1666 = vmul.f32 %v1597, 0.0051020407
    %v1667 = vmul.f32 %v1601, 0.0051020407
    %v1668 = vmul.f32 %v1605, 0.0051020407
    %v1669 = vmul.f32 %v1609, 0.0051020407
    %v1670 = vmul.f32 %v1613, 0.0051020407
    %v1671 = vmul.f32 %v1617, 0.0051020407
    %v1672 = vmul.f32 %v1621, 0.0051020407
    %v1673 = vmul.f32 %v1625, 0.0051020407
    %v1674 = vmul.f32 %v1626, %v1626
    %v1675 = vmul.f32 %v1627, %v1627
    %v1676 = vmul.f32 %v1628, %v1628
    %v1677 = vmul.f32 %v1629, %v1629
    %v1678 = vmul.f32 %v1630, %v1630
    %v1679 = vmul.f32 %v1631, %v1631
    %v1680 = vmul.f32 %v1632, %v1632
    %v1681 = vmul.f32 %v1633, %v1633
    %v1682 = vmul.f32 %v1634, %v1634
    %v1683 = vmul.f32 %v1635, %v1635
    %v1684 = vmul.f32 %v1636, %v1636
    %v1685 = vmul.f32 %v1637, %v1637
    %v1686 = vmul.f32 %v1638, %v1638
    %v1687 = vmul.f32 %v1639, %v1639
    %v1688 = vmul.f32 %v1640, %v1640
    %v1689 = vmul.f32 %v1641, %v1641
    %v1690 = vmul.f32 %v1642, %v1642
    %v1691 = vmul.f32 %v1643, %v1643
    %v1692 = vmul.f32 %v1644, %v1644
    %v1693 = vmul.f32 %v1645, %v1645
    %v1694 = vmul.f32 %v1646, %v1646
    %v1695 = vmul.f32 %v1647, %v1647
    %v1696 = vmul.f32 %v1648, %v1648
    %v1697 = vmul.f32 %v1649, %v1649
    %v1698 = vsub.f32 %v1650, %v1674
    %v1699 = vsub.f32 %v1651, %v1675
    %v1700 = vsub.f32 %v1652, %v1676
    %v1701 = vsub.f32 %v1653, %v1677
    %v1702 = vsub.f32 %v1654, %v1678
    %v1703 = vsub.f32 %v1655, %v1679
    %v1704 = vsub.f32 %v1656, %v1680
    %v1705 = vsub.f32 %v1657, %v1681
    %v1706 = vsub.f32 %v1658, %v1682
    %v1707 = vsub.f32 %v1659, %v1683
    %v1708 = vsub.f32 %v1660, %v1684
    %v1709 = vsub.f32 %v1661, %v1685
    %v1710 = vsub.f32 %v1662, %v1686
    %v1711 = vsub.f32 %v1663, %v1687
    %v1712 = vsub.f32 %v1664, %v1688
    %v1713 = vsub.f32 %v1665, %v1689
    %v1714 = vsub.f32 %v1666, %v1690
    %v1715 = vsub.f32 %v1667, %v1691
    %v1716 = vsub.f32 %v1668, %v1692
    %v1717 = vsub.f32 %v1669, %v1693
    %v1718 = vsub.f32 %v1670, %v1694
    %v1719 = vsub.f32 %v1671, %v1695
    %v1720 = vsub.f32 %v1672, %v1696
    %v1721 = vsub.f32 %v1673, %v1697
    %v1722 = vmax.f32 %v1698, 0.0
    %v1723 = vmax.f32 %v1699, 0.0
    %v1724 = vmax.f32 %v1700, 0.0
    %v1725 = vmax.f32 %v1701, 0.0
    %v1726 = vmax.f32 %v1702, 0.0
    %v1727 = vmax.f32 %v1703, 0.0
    %v1728 = vmax.f32 %v1704, 0.0
    %v1729 = vmax.f32 %v1705, 0.0
    %v1730 = vmax.f32 %v1706, 0.0
    %v1731 = vmax.f32 %v1707, 0.0
    %v1732 = vmax.f32 %v1708, 0.0
    %v1733 = vmax.f32 %v1709, 0.0
    %v1734 = vmax.f32 %v1710, 0.0
    %v1735 = vmax.f32 %v1711, 0.0
    %v1736 = vmax.f32 %v1712, 0.0
    %v1737 = vmax.f32 %v1713, 0.0
    %v1738 = vmax.f32 %v1714, 0.0
    %v1739 = vmax.f32 %v1715, 0.0
    %v1740 = vmax.f32 %v1716, 0.0
    %v1741 = vmax.f32 %v1717, 0.0
    %v1742 = vmax.f32 %v1718, 0.0
    %v1743 = vmax.f32 %v1719, 0.0
    %v1744 = vmax.f32 %v1720, 0.0
    %v1745 = vmax.f32 %v1721, 0.0
    %v1746 = vadd.f32 %v1722, 1e-05
    %v1747 = vadd.f32 %v1723, 1e-05
    %v1748 = vadd.f32 %v1724, 1e-05
    %v1749 = vadd.f32 %v1725, 1e-05
    %v1750 = vadd.f32 %v1726, 1e-05
    %v1751 = vadd.f32 %v1727, 1e-05
    %v1752 = vadd.f32 %v1728, 1e-05
    %v1753 = vadd.f32 %v1729, 1e-05
    %v1754 = vadd.f32 %v1730, 1e-05
    %v1755 = vadd.f32 %v1731, 1e-05
    %v1756 = vadd.f32 %v1732, 1e-05
    %v1757 = vadd.f32 %v1733, 1e-05
    %v1758 = vadd.f32 %v1734, 1e-05
    %v1759 = vadd.f32 %v1735, 1e-05
    %v1760 = vadd.f32 %v1736, 1e-05
    %v1761 = vadd.f32 %v1737, 1e-05
    %v1762 = vadd.f32 %v1738, 1e-05
    %v1763 = vadd.f32 %v1739, 1e-05
    %v1764 = vadd.f32 %v1740, 1e-05
    %v1765 = vadd.f32 %v1741, 1e-05
    %v1766 = vadd.f32 %v1742, 1e-05
    %v1767 = vadd.f32 %v1743, 1e-05
    %v1768 = vadd.f32 %v1744, 1e-05
    %v1769 = vadd.f32 %v1745, 1e-05
    %v1770 = vrsqrt.pop %v1746
    %v1771 = vrsqrt.pop %v1747
    %v1772 = vrsqrt.pop %v1748
    %v1773 = vrsqrt.pop %v1749
    %v1774 = vrsqrt.pop %v1750
    %v1775 = vrsqrt.pop %v1751
    %v1776 = vrsqrt.pop %v1752
    %v1777 = vrsqrt.pop %v1753
    %v1778 = vrsqrt.pop %v1754
    %v1779 = vrsqrt.pop %v1755
    %v1780 = vrsqrt.pop %v1756
    %v1781 = vrsqrt.pop %v1757
    %v1782 = vrsqrt.pop %v1758
    %v1783 = vrsqrt.pop %v1759
    %v1784 = vrsqrt.pop %v1760
    %v1785 = vrsqrt.pop %v1761
    %v1786 = vrsqrt.pop %v1762
    %v1787 = vrsqrt.pop %v1763
    %v1788 = vrsqrt.pop %v1764
    %v1789 = vrsqrt.pop %v1765
    %v1790 = vrsqrt.pop %v1766
    %v1791 = vrsqrt.pop %v1767
    %v1792 = vrsqrt.pop %v1768
    %v1793 = vrsqrt.pop %v1769
    %v1794 = vld [vmem:[%s2] sm:$0xff]
    %v1795 = vld [vmem:[%s2 + $0x8] sm:$0xff]
    %v1796 = vld [vmem:[%s2 + $0x10] sm:$0xff]
    %v1797 = vld [vmem:[%s2 + $0x18] sm:$0xff]
    %v1798 = vld [vmem:[%s2 + $0x20] sm:$0xff]
    %v1799 = vld [vmem:[%s2 + $0x28] sm:$0xff]
    %v1800 = vld [vmem:[%s2 + $0x30] sm:$0xff]
    %v1801 = vld [vmem:[%s2 + $0x38] sm:$0xff]
    %v1802 = vld [vmem:[%s2 + $0x40] sm:$0xff]
    %v1803 = vld [vmem:[%s2 + $0x48] sm:$0xff]
    %v1804 = vld [vmem:[%s2 + $0x50] sm:$0xff]
    %v1805 = vld [vmem:[%s2 + $0x58] sm:$0xff]
    %v1806 = vld [vmem:[%s2 + $0x60] sm:$0xff]
    %v1807 = vld [vmem:[%s2 + $0x68] sm:$0xff]
    %v1808 = vld [vmem:[%s2 + $0x70] sm:$0xff]
    %v1809 = vld [vmem:[%s2 + $0x78] sm:$0xff]
    %v1810 = vld [vmem:[%s2 + $0x80] sm:$0xff]
    %v1811 = vld [vmem:[%s2 + $0x88] sm:$0xff]
    %v1812 = vld [vmem:[%s2 + $0x90] sm:$0xff]
    %v1813 = vld [vmem:[%s2 + $0x98] sm:$0xff]
    %v1814 = vld [vmem:[%s2 + $0xa0] sm:$0xff]
    %v1815 = vld [vmem:[%s2 + $0xa8] sm:$0xff]
    %v1816 = vld [vmem:[%s2 + $0xb0] sm:$0xff]
    %v1817 = vld [vmem:[%s2 + $0xb8] sm:$0xff]
    %v1818 = vmul.f32 %v1794, %v1770
    %v1819 = vmul.f32 %v1795, %v1771
    %v1820 = vmul.f32 %v1796, %v1772
    %v1821 = vmul.f32 %v1797, %v1773
    %v1822 = vmul.f32 %v1798, %v1774
    %v1823 = vmul.f32 %v1799, %v1775
    %v1824 = vmul.f32 %v1800, %v1776
    %v1825 = vmul.f32 %v1801, %v1777
    %v1826 = vmul.f32 %v1802, %v1778
    %v1827 = vmul.f32 %v1803, %v1779
    %v1828 = vmul.f32 %v1804, %v1780
    %v1829 = vmul.f32 %v1805, %v1781
    %v1830 = vmul.f32 %v1806, %v1782
    %v1831 = vmul.f32 %v1807, %v1783
    %v1832 = vmul.f32 %v1808, %v1784
    %v1833 = vmul.f32 %v1809, %v1785
    %v1834 = vmul.f32 %v1810, %v1786
    %v1835 = vmul.f32 %v1811, %v1787
    %v1836 = vmul.f32 %v1812, %v1788
    %v1837 = vmul.f32 %v1813, %v1789
    %v1838 = vmul.f32 %v1814, %v1790
    %v1839 = vmul.f32 %v1815, %v1791
    %v1840 = vmul.f32 %v1816, %v1792
    %v1841 = vmul.f32 %v1817, %v1793
    %v1842 = vld [vmem:[%s3] sm:$0xff]
    %v1843 = vld [vmem:[%s3 + $0x8] sm:$0xff]
    %v1844 = vld [vmem:[%s3 + $0x10] sm:$0xff]
    %v1845 = vld [vmem:[%s3 + $0x18] sm:$0xff]
    %v1846 = vld [vmem:[%s3 + $0x20] sm:$0xff]
    %v1847 = vld [vmem:[%s3 + $0x28] sm:$0xff]
    %v1848 = vld [vmem:[%s3 + $0x30] sm:$0xff]
    %v1849 = vld [vmem:[%s3 + $0x38] sm:$0xff]
    %v1850 = vld [vmem:[%s3 + $0x40] sm:$0xff]
    %v1851 = vld [vmem:[%s3 + $0x48] sm:$0xff]
    %v1852 = vld [vmem:[%s3 + $0x50] sm:$0xff]
    %v1853 = vld [vmem:[%s3 + $0x58] sm:$0xff]
    %v1854 = vld [vmem:[%s3 + $0x60] sm:$0xff]
    %v1855 = vld [vmem:[%s3 + $0x68] sm:$0xff]
    %v1856 = vld [vmem:[%s3 + $0x70] sm:$0xff]
    %v1857 = vld [vmem:[%s3 + $0x78] sm:$0xff]
    %v1858 = vld [vmem:[%s3 + $0x80] sm:$0xff]
    %v1859 = vld [vmem:[%s3 + $0x88] sm:$0xff]
    %v1860 = vld [vmem:[%s3 + $0x90] sm:$0xff]
    %v1861 = vld [vmem:[%s3 + $0x98] sm:$0xff]
    %v1862 = vld [vmem:[%s3 + $0xa0] sm:$0xff]
    %v1863 = vld [vmem:[%s3 + $0xa8] sm:$0xff]
    %v1864 = vld [vmem:[%s3 + $0xb0] sm:$0xff]
    %v1865 = vld [vmem:[%s3 + $0xb8] sm:$0xff]
    %v1866 = vmul.f32 %v1626, %v1818
    %v1867 = vmul.f32 %v1627, %v1819
    %v1868 = vmul.f32 %v1628, %v1820
    %v1869 = vmul.f32 %v1629, %v1821
    %v1870 = vmul.f32 %v1630, %v1822
    %v1871 = vmul.f32 %v1631, %v1823
    %v1872 = vmul.f32 %v1632, %v1824
    %v1873 = vmul.f32 %v1633, %v1825
    %v1874 = vmul.f32 %v1634, %v1826
    %v1875 = vmul.f32 %v1635, %v1827
    %v1876 = vmul.f32 %v1636, %v1828
    %v1877 = vmul.f32 %v1637, %v1829
    %v1878 = vmul.f32 %v1638, %v1830
    %v1879 = vmul.f32 %v1639, %v1831
    %v1880 = vmul.f32 %v1640, %v1832
    %v1881 = vmul.f32 %v1641, %v1833
    %v1882 = vmul.f32 %v1642, %v1834
    %v1883 = vmul.f32 %v1643, %v1835
    %v1884 = vmul.f32 %v1644, %v1836
    %v1885 = vmul.f32 %v1645, %v1837
    %v1886 = vmul.f32 %v1646, %v1838
    %v1887 = vmul.f32 %v1647, %v1839
    %v1888 = vmul.f32 %v1648, %v1840
    %v1889 = vmul.f32 %v1649, %v1841
    %v1890 = vsub.f32 %v1842, %v1866
    %v1891 = vsub.f32 %v1843, %v1867
    %v1892 = vsub.f32 %v1844, %v1868
    %v1893 = vsub.f32 %v1845, %v1869
    %v1894 = vsub.f32 %v1846, %v1870
    %v1895 = vsub.f32 %v1847, %v1871
    %v1896 = vsub.f32 %v1848, %v1872
    %v1897 = vsub.f32 %v1849, %v1873
    %v1898 = vsub.f32 %v1850, %v1874
    %v1899 = vsub.f32 %v1851, %v1875
    %v1900 = vsub.f32 %v1852, %v1876
    %v1901 = vsub.f32 %v1853, %v1877
    %v1902 = vsub.f32 %v1854, %v1878
    %v1903 = vsub.f32 %v1855, %v1879
    %v1904 = vsub.f32 %v1856, %v1880
    %v1905 = vsub.f32 %v1857, %v1881
    %v1906 = vsub.f32 %v1858, %v1882
    %v1907 = vsub.f32 %v1859, %v1883
    %v1908 = vsub.f32 %v1860, %v1884
    %v1909 = vsub.f32 %v1861, %v1885
    %v1910 = vsub.f32 %v1862, %v1886
    %v1911 = vsub.f32 %v1863, %v1887
    %v1912 = vsub.f32 %v1864, %v1888
    %v1913 = vsub.f32 %v1865, %v1889
    %1915 = vset.pattern.permute.xlu0 0
    %1916 = vperm.xlu0 %1915, %v1818
    %v1917 = vpop.permute.xlu0 %1916
    %1920 = vset.pattern.permute.xlu0 0
    %1921 = vperm.xlu0 %1920, %v1819
    %v1922 = vpop.permute.xlu0 %1921
    %1925 = vset.pattern.permute.xlu0 0
    %1926 = vperm.xlu0 %1925, %v1820
    %v1927 = vpop.permute.xlu0 %1926
    %1930 = vset.pattern.permute.xlu0 0
    %1931 = vperm.xlu0 %1930, %v1821
    %v1932 = vpop.permute.xlu0 %1931
    %1935 = vset.pattern.permute.xlu0 0
    %1936 = vperm.xlu0 %1935, %v1822
    %v1937 = vpop.permute.xlu0 %1936
    %1940 = vset.pattern.permute.xlu0 0
    %1941 = vperm.xlu0 %1940, %v1823
    %v1942 = vpop.permute.xlu0 %1941
    %1945 = vset.pattern.permute.xlu0 0
    %1946 = vperm.xlu0 %1945, %v1824
    %v1947 = vpop.permute.xlu0 %1946
    %1950 = vset.pattern.permute.xlu0 0
    %1951 = vperm.xlu0 %1950, %v1825
    %v1952 = vpop.permute.xlu0 %1951
    %1955 = vset.pattern.permute.xlu0 0
    %1956 = vperm.xlu0 %1955, %v1826
    %v1957 = vpop.permute.xlu0 %1956
    %1960 = vset.pattern.permute.xlu0 0
    %1961 = vperm.xlu0 %1960, %v1827
    %v1962 = vpop.permute.xlu0 %1961
    %1965 = vset.pattern.permute.xlu0 0
    %1966 = vperm.xlu0 %1965, %v1828
    %v1967 = vpop.permute.xlu0 %1966
    %1970 = vset.pattern.permute.xlu0 0
    %1971 = vperm.xlu0 %1970, %v1829
    %v1972 = vpop.permute.xlu0 %1971
    %1975 = vset.pattern.permute.xlu0 0
    %1976 = vperm.xlu0 %1975, %v1830
    %v1977 = vpop.permute.xlu0 %1976
    %1980 = vset.pattern.permute.xlu0 0
    %1981 = vperm.xlu0 %1980, %v1831
    %v1982 = vpop.permute.xlu0 %1981
    %1985 = vset.pattern.permute.xlu0 0
    %1986 = vperm.xlu0 %1985, %v1832
    %v1987 = vpop.permute.xlu0 %1986
    %1990 = vset.pattern.permute.xlu0 0
    %1991 = vperm.xlu0 %1990, %v1833
    %v1992 = vpop.permute.xlu0 %1991
    %1995 = vset.pattern.permute.xlu0 0
    %1996 = vperm.xlu0 %1995, %v1834
    %v1997 = vpop.permute.xlu0 %1996
    %2000 = vset.pattern.permute.xlu0 0
    %2001 = vperm.xlu0 %2000, %v1835
    %v2002 = vpop.permute.xlu0 %2001
    %2005 = vset.pattern.permute.xlu0 0
    %2006 = vperm.xlu0 %2005, %v1836
    %v2007 = vpop.permute.xlu0 %2006
    %2010 = vset.pattern.permute.xlu0 0
    %2011 = vperm.xlu0 %2010, %v1837
    %v2012 = vpop.permute.xlu0 %2011
    %2015 = vset.pattern.permute.xlu0 0
    %2016 = vperm.xlu0 %2015, %v1838
    %v2017 = vpop.permute.xlu0 %2016
    %2020 = vset.pattern.permute.xlu0 0
    %2021 = vperm.xlu0 %2020, %v1839
    %v2022 = vpop.permute.xlu0 %2021
    %2025 = vset.pattern.permute.xlu0 0
    %2026 = vperm.xlu0 %2025, %v1840
    %v2027 = vpop.permute.xlu0 %2026
    %2030 = vset.pattern.permute.xlu0 0
    %2031 = vperm.xlu0 %2030, %v1841
    %v2032 = vpop.permute.xlu0 %2031
    %v2034 = vmul.f32 %v1267, %v1917
    %v2035 = vmul.f32 %v1269, %v1917
    %v2036 = vmul.f32 %v1271, %v1922
    %v2037 = vmul.f32 %v1273, %v1922
    %v2038 = vmul.f32 %v1277, %v1927
    %v2039 = vmul.f32 %v1279, %v1927
    %v2040 = vmul.f32 %v1281, %v1932
    %v2041 = vmul.f32 %v1283, %v1932
    %v2042 = vmul.f32 %v1287, %v1937
    %v2043 = vmul.f32 %v1289, %v1937
    %v2044 = vmul.f32 %v1291, %v1942
    %v2045 = vmul.f32 %v1293, %v1942
    %v2046 = vmul.f32 %v1297, %v1947
    %v2047 = vmul.f32 %v1299, %v1947
    %v2048 = vmul.f32 %v1301, %v1952
    %v2049 = vmul.f32 %v1303, %v1952
    %v2050 = vmul.f32 %v1307, %v1957
    %v2051 = vmul.f32 %v1309, %v1957
    %v2052 = vmul.f32 %v1311, %v1962
    %v2053 = vmul.f32 %v1313, %v1962
    %v2054 = vmul.f32 %v1317, %v1967
    %v2055 = vmul.f32 %v1319, %v1967
    %v2056 = vmul.f32 %v1321, %v1972
    %v2057 = vmul.f32 %v1323, %v1972
    %v2058 = vmul.f32 %v1327, %v1977
    %v2059 = vmul.f32 %v1329, %v1977
    %v2060 = vmul.f32 %v1331, %v1982
    %v2061 = vmul.f32 %v1333, %v1982
    %v2062 = vmul.f32 %v1337, %v1987
    %v2063 = vmul.f32 %v1339, %v1987
    %v2064 = vmul.f32 %v1341, %v1992
    %v2065 = vmul.f32 %v1343, %v1992
    %v2066 = vmul.f32 %v1347, %v1997
    %v2067 = vmul.f32 %v1349, %v1997
    %v2068 = vmul.f32 %v1351, %v2002
    %v2069 = vmul.f32 %v1353, %v2002
    %v2070 = vmul.f32 %v1357, %v2007
    %v2071 = vmul.f32 %v1359, %v2007
    %v2072 = vmul.f32 %v1361, %v2012
    %v2073 = vmul.f32 %v1363, %v2012
    %v2074 = vmul.f32 %v1367, %v2017
    %v2075 = vmul.f32 %v1369, %v2017
    %v2076 = vmul.f32 %v1371, %v2022
    %v2077 = vmul.f32 %v1373, %v2022
    %v2078 = vmul.f32 %v1377, %v2027
    %v2079 = vmul.f32 %v1379, %v2027
    %v2080 = vmul.f32 %v1381, %v2032
    %v2081 = vmul.f32 %v1383, %v2032
    %2083 = vset.pattern.permute.xlu0 0
    %2084 = vperm.xlu0 %2083, %v1890
    %v2085 = vpop.permute.xlu0 %2084
    %2088 = vset.pattern.permute.xlu0 0
    %2089 = vperm.xlu0 %2088, %v1891
    %v2090 = vpop.permute.xlu0 %2089
    %2093 = vset.pattern.permute.xlu0 0
    %2094 = vperm.xlu0 %2093, %v1892
    %v2095 = vpop.permute.xlu0 %2094
    %2098 = vset.pattern.permute.xlu0 0
    %2099 = vperm.xlu0 %2098, %v1893
    %v2100 = vpop.permute.xlu0 %2099
    %2103 = vset.pattern.permute.xlu0 0
    %2104 = vperm.xlu0 %2103, %v1894
    %v2105 = vpop.permute.xlu0 %2104
    %2108 = vset.pattern.permute.xlu0 0
    %2109 = vperm.xlu0 %2108, %v1895
    %v2110 = vpop.permute.xlu0 %2109
    %2113 = vset.pattern.permute.xlu0 0
    %2114 = vperm.xlu0 %2113, %v1896
    %v2115 = vpop.permute.xlu0 %2114
    %2118 = vset.pattern.permute.xlu0 0
    %2119 = vperm.xlu0 %2118, %v1897
    %v2120 = vpop.permute.xlu0 %2119
    %2123 = vset.pattern.permute.xlu0 0
    %2124 = vperm.xlu0 %2123, %v1898
    %v2125 = vpop.permute.xlu0 %2124
    %2128 = vset.pattern.permute.xlu0 0
    %2129 = vperm.xlu0 %2128, %v1899
    %v2130 = vpop.permute.xlu0 %2129
    %2133 = vset.pattern.permute.xlu0 0
    %2134 = vperm.xlu0 %2133, %v1900
    %v2135 = vpop.permute.xlu0 %2134
    %2138 = vset.pattern.permute.xlu0 0
    %2139 = vperm.xlu0 %2138, %v1901
    %v2140 = vpop.permute.xlu0 %2139
    %2143 = vset.pattern.permute.xlu0 0
    %2144 = vperm.xlu0 %2143, %v1902
    %v2145 = vpop.permute.xlu0 %2144
    %2148 = vset.pattern.permute.xlu0 0
    %2149 = vperm.xlu0 %2148, %v1903
    %v2150 = vpop.permute.xlu0 %2149
    %2153 = vset.pattern.permute.xlu0 0
    %2154 = vperm.xlu0 %2153, %v1904
    %v2155 = vpop.permute.xlu0 %2154
    %2158 = vset.pattern.permute.xlu0 0
    %2159 = vperm.xlu0 %2158, %v1905
    %v2160 = vpop.permute.xlu0 %2159
    %2163 = vset.pattern.permute.xlu0 0
    %2164 = vperm.xlu0 %2163, %v1906
    %v2165 = vpop.permute.xlu0 %2164
    %2168 = vset.pattern.permute.xlu0 0
    %2169 = vperm.xlu0 %2168, %v1907
    %v2170 = vpop.permute.xlu0 %2169
    %2173 = vset.pattern.permute.xlu0 0
    %2174 = vperm.xlu0 %2173, %v1908
    %v2175 = vpop.permute.xlu0 %2174
    %2178 = vset.pattern.permute.xlu0 0
    %2179 = vperm.xlu0 %2178, %v1909
    %v2180 = vpop.permute.xlu0 %2179
    %2183 = vset.pattern.permute.xlu0 0
    %2184 = vperm.xlu0 %2183, %v1910
    %v2185 = vpop.permute.xlu0 %2184
    %2188 = vset.pattern.permute.xlu0 0
    %2189 = vperm.xlu0 %2188, %v1911
    %v2190 = vpop.permute.xlu0 %2189
    %2193 = vset.pattern.permute.xlu0 0
    %2194 = vperm.xlu0 %2193, %v1912
    %v2195 = vpop.permute.xlu0 %2194
    %2198 = vset.pattern.permute.xlu0 0
    %2199 = vperm.xlu0 %2198, %v1913
    %v2200 = vpop.permute.xlu0 %2199
    %v2202 = vadd.f32 %v2034, %v2085
    %v2203 = vadd.f32 %v2035, %v2085
    %v2204 = vadd.f32 %v2036, %v2090
    %v2205 = vadd.f32 %v2037, %v2090
    %v2206 = vadd.f32 %v2038, %v2095
    %v2207 = vadd.f32 %v2039, %v2095
    %v2208 = vadd.f32 %v2040, %v2100
    %v2209 = vadd.f32 %v2041, %v2100
    %v2210 = vadd.f32 %v2042, %v2105
    %v2211 = vadd.f32 %v2043, %v2105
    %v2212 = vadd.f32 %v2044, %v2110
    %v2213 = vadd.f32 %v2045, %v2110
    %v2214 = vadd.f32 %v2046, %v2115
    %v2215 = vadd.f32 %v2047, %v2115
    %v2216 = vadd.f32 %v2048, %v2120
    %v2217 = vadd.f32 %v2049, %v2120
    %v2218 = vadd.f32 %v2050, %v2125
    %v2219 = vadd.f32 %v2051, %v2125
    %v2220 = vadd.f32 %v2052, %v2130
    %v2221 = vadd.f32 %v2053, %v2130
    %v2222 = vadd.f32 %v2054, %v2135
    %v2223 = vadd.f32 %v2055, %v2135
    %v2224 = vadd.f32 %v2056, %v2140
    %v2225 = vadd.f32 %v2057, %v2140
    %v2226 = vadd.f32 %v2058, %v2145
    %v2227 = vadd.f32 %v2059, %v2145
    %v2228 = vadd.f32 %v2060, %v2150
    %v2229 = vadd.f32 %v2061, %v2150
    %v2230 = vadd.f32 %v2062, %v2155
    %v2231 = vadd.f32 %v2063, %v2155
    %v2232 = vadd.f32 %v2064, %v2160
    %v2233 = vadd.f32 %v2065, %v2160
    %v2234 = vadd.f32 %v2066, %v2165
    %v2235 = vadd.f32 %v2067, %v2165
    %v2236 = vadd.f32 %v2068, %v2170
    %v2237 = vadd.f32 %v2069, %v2170
    %v2238 = vadd.f32 %v2070, %v2175
    %v2239 = vadd.f32 %v2071, %v2175
    %v2240 = vadd.f32 %v2072, %v2180
    %v2241 = vadd.f32 %v2073, %v2180
    %v2242 = vadd.f32 %v2074, %v2185
    %v2243 = vadd.f32 %v2075, %v2185
    %v2244 = vadd.f32 %v2076, %v2190
    %v2245 = vadd.f32 %v2077, %v2190
    %v2246 = vadd.f32 %v2078, %v2195
    %v2247 = vadd.f32 %v2079, %v2195
    %v2248 = vadd.f32 %v2080, %v2200
    %v2249 = vadd.f32 %v2081, %v2200
    %v2250 = vmax.f32 %v2202, 0.0
    %v2251 = vmax.f32 %v2203, 0.0
    %v2252 = vmax.f32 %v2204, 0.0
    %v2253 = vmax.f32 %v2205, 0.0
    %v2254 = vmax.f32 %v2206, 0.0
    %v2255 = vmax.f32 %v2207, 0.0
    %v2256 = vmax.f32 %v2208, 0.0
    %v2257 = vmax.f32 %v2209, 0.0
    %v2258 = vmax.f32 %v2210, 0.0
    %v2259 = vmax.f32 %v2211, 0.0
    %v2260 = vmax.f32 %v2212, 0.0
    %v2261 = vmax.f32 %v2213, 0.0
    %v2262 = vmax.f32 %v2214, 0.0
    %v2263 = vmax.f32 %v2215, 0.0
    %v2264 = vmax.f32 %v2216, 0.0
    %v2265 = vmax.f32 %v2217, 0.0
    %v2266 = vmax.f32 %v2218, 0.0
    %v2267 = vmax.f32 %v2219, 0.0
    %v2268 = vmax.f32 %v2220, 0.0
    %v2269 = vmax.f32 %v2221, 0.0
    %v2270 = vmax.f32 %v2222, 0.0
    %v2271 = vmax.f32 %v2223, 0.0
    %v2272 = vmax.f32 %v2224, 0.0
    %v2273 = vmax.f32 %v2225, 0.0
    %v2274 = vmax.f32 %v2226, 0.0
    %v2275 = vmax.f32 %v2227, 0.0
    %v2276 = vmax.f32 %v2228, 0.0
    %v2277 = vmax.f32 %v2229, 0.0
    %v2278 = vmax.f32 %v2230, 0.0
    %v2279 = vmax.f32 %v2231, 0.0
    %v2280 = vmax.f32 %v2232, 0.0
    %v2281 = vmax.f32 %v2233, 0.0
    %v2282 = vmax.f32 %v2234, 0.0
    %v2283 = vmax.f32 %v2235, 0.0
    %v2284 = vmax.f32 %v2236, 0.0
    %v2285 = vmax.f32 %v2237, 0.0
    %v2286 = vmax.f32 %v2238, 0.0
    %v2287 = vmax.f32 %v2239, 0.0
    %v2288 = vmax.f32 %v2240, 0.0
    %v2289 = vmax.f32 %v2241, 0.0
    %v2290 = vmax.f32 %v2242, 0.0
    %v2291 = vmax.f32 %v2243, 0.0
    %v2292 = vmax.f32 %v2244, 0.0
    %v2293 = vmax.f32 %v2245, 0.0
    %v2294 = vmax.f32 %v2246, 0.0
    %v2295 = vmax.f32 %v2247, 0.0
    %v2296 = vmax.f32 %v2248, 0.0
    %v2297 = vmax.f32 %v2249, 0.0
    %2298 = vst [vmem:[#allocation2] sm:$0xff] %v2250
    %2299 = vst.msk [vmem:[#allocation2 + $0x8] sm:$0xff] %vm1385, %v2251
    %2300 = vst [vmem:[#allocation2 + $0x10] sm:$0xff] %v2252
    %2301 = vst.msk [vmem:[#allocation2 + $0x18] sm:$0xff] %vm1385, %v2253
    %2302 = vst [vmem:[#allocation2 + $0x20] sm:$0xff] %v2254
    %2303 = vst.msk [vmem:[#allocation2 + $0x28] sm:$0xff] %vm1385, %v2255
    %2304 = vst [vmem:[#allocation2 + $0x30] sm:$0xff] %v2256
    %2305 = vst.msk [vmem:[#allocation2 + $0x38] sm:$0xff] %vm1385, %v2257
    %2306 = vst [vmem:[#allocation2 + $0x40] sm:$0xff] %v2258
    %2307 = vst.msk [vmem:[#allocation2 + $0x48] sm:$0xff] %vm1385, %v2259
    %2308 = vst [vmem:[#allocation2 + $0x50] sm:$0xff] %v2260
    %2309 = vst.msk [vmem:[#allocation2 + $0x58] sm:$0xff] %vm1385, %v2261
    %2310 = vst [vmem:[#allocation2 + $0x60] sm:$0xff] %v2262
    %2311 = vst.msk [vmem:[#allocation2 + $0x68] sm:$0xff] %vm1385, %v2263
    %2312 = vst [vmem:[#allocation2 + $0x70] sm:$0xff] %v2264
    %2313 = vst.msk [vmem:[#allocation2 + $0x78] sm:$0xff] %vm1385, %v2265
    %2314 = vst [vmem:[#allocation2 + $0x80] sm:$0xff] %v2266
    %2315 = vst.msk [vmem:[#allocation2 + $0x88] sm:$0xff] %vm1385, %v2267
    %2316 = vst [vmem:[#allocation2 + $0x90] sm:$0xff] %v2268
    %2317 = vst.msk [vmem:[#allocation2 + $0x98] sm:$0xff] %vm1385, %v2269
    %2318 = vst [vmem:[#allocation2 + $0xa0] sm:$0xff] %v2270
    %2319 = vst.msk [vmem:[#allocation2 + $0xa8] sm:$0xff] %vm1385, %v2271
    %2320 = vst [vmem:[#allocation2 + $0xb0] sm:$0xff] %v2272
    %2321 = vst.msk [vmem:[#allocation2 + $0xb8] sm:$0xff] %vm1385, %v2273
    %2322 = vst [vmem:[#allocation2 + $0xc0] sm:$0xff] %v2274
    %2323 = vst.msk [vmem:[#allocation2 + $0xc8] sm:$0xff] %vm1385, %v2275
    %2324 = vst [vmem:[#allocation2 + $0xd0] sm:$0xff] %v2276
    %2325 = vst.msk [vmem:[#allocation2 + $0xd8] sm:$0xff] %vm1385, %v2277
    %2326 = vst [vmem:[#allocation2 + $0xe0] sm:$0xff] %v2278
    %2327 = vst.msk [vmem:[#allocation2 + $0xe8] sm:$0xff] %vm1385, %v2279
    %2328 = vst [vmem:[#allocation2 + $0xf0] sm:$0xff] %v2280
    %2329 = vst.msk [vmem:[#allocation2 + $0xf8] sm:$0xff] %vm1385, %v2281
    %2330 = vst [vmem:[#allocation2 + $0x100] sm:$0xff] %v2282
    %2331 = vst.msk [vmem:[#allocation2 + $0x108] sm:$0xff] %vm1385, %v2283
    %2332 = vst [vmem:[#allocation2 + $0x110] sm:$0xff] %v2284
    %2333 = vst.msk [vmem:[#allocation2 + $0x118] sm:$0xff] %vm1385, %v2285
    %2334 = vst [vmem:[#allocation2 + $0x120] sm:$0xff] %v2286
    %2335 = vst.msk [vmem:[#allocation2 + $0x128] sm:$0xff] %vm1385, %v2287
    %2336 = vst [vmem:[#allocation2 + $0x130] sm:$0xff] %v2288
    %2337 = vst.msk [vmem:[#allocation2 + $0x138] sm:$0xff] %vm1385, %v2289
    %2338 = vst [vmem:[#allocation2 + $0x140] sm:$0xff] %v2290
    %2339 = vst.msk [vmem:[#allocation2 + $0x148] sm:$0xff] %vm1385, %v2291
    %2340 = vst [vmem:[#allocation2 + $0x150] sm:$0xff] %v2292
    %2341 = vst.msk [vmem:[#allocation2 + $0x158] sm:$0xff] %vm1385, %v2293
    %2342 = vst [vmem:[#allocation2 + $0x160] sm:$0xff] %v2294
    %2343 = vst.msk [vmem:[#allocation2 + $0x168] sm:$0xff] %vm1385, %v2295
    %2344 = vst [vmem:[#allocation2 + $0x170] sm:$0xff] %v2296
    %2345 = vst.msk [vmem:[#allocation2 + $0x178] sm:$0xff] %vm1385, %v2297
    // Predicated region
    $region18: #{tpu_custom_call.1} parent=1 // pred_check
      _
    $region19: #{tpu_custom_call.1} parent=1 // pred_check_branch
      %2347 = sbr.rel (0) target = $region21
    $region20: #{tpu_custom_call.1} parent=1 // pred_region
      %s2349 = ssub.s32 6144, 6144
      %2350 = vsyncadd [#allocation3], %s2349
      %s2351 = sshll.u32 [#allocation2], 4
      %s2352 = int_to_ptr.vmem [resolvable:$true] %s2351
      %2357 = dma.vmem_to_hbm [thread:$0]  %s2352, 6144, %s4, [#allocation3], 256, 256, 16
    $region21: #{tpu_custom_call.1} parent=1 // pred_fallthru
      _
    // Predicated region
    $region22: #{tpu_custom_call.1} parent=1 // pred_check
      _
    $region23: #{tpu_custom_call.1} parent=1 // pred_check_branch
      %2359 = sbr.rel (0) target = $region25
    $region24: #{tpu_custom_call.1} parent=1 // pred_region
      %2360 = dma.done [#allocation3], 6144
    $region25: #{tpu_custom_call.1} parent=1 // pred_fallthru
      _
    %2361 = vsyncpa [#allocation3], 1

</llo_original>
